<compile_context>
chip_gen: v7x
topology: tpu7x:2x2x1
jax: 0.10.0
libtpu: 0.0.40
codegen_flags: <defaults>
</compile_context>

<pallas_src>
import functools

import jax
import jax.numpy as jnp
import numpy as np
from jax import lax
from jax.experimental import pallas as pl
from jax.experimental.pallas import tpu as pltpu

_HIGHEST = lax.Precision.HIGHEST   # used only by the pure-JAX reference


def _dot(a, b):
    return jnp.dot(a, b, preferred_element_type=jnp.float32)


def _shift_lanes(v, k):
    """out[:, p] = v[:, p + k]; positions past the end read 0 (wrap lanes are masked anyway)."""
    pad = jnp.zeros((v.shape[0], k), v.dtype)
    return jnp.concatenate([v[:, k:], pad], axis=1)


# ------------------------------------ fused forward kernel ------------------------------------
def _fused_kernel(s_ref, d_ref, w1_ref, b1_ref, w2t_ref, b2_ref, wct_ref, bc_ref,
                  wd1_ref, bd1_ref, wd2_ref, bd2_ref, wh_ref, bh_ref, o_ref, *,
                  spatial, c_dec1):
    H, W = spatial
    HW = H * W

    # channel-major operands: channels on sublanes, flat h*w on lanes.
    x = jnp.concatenate([s_ref[...], d_ref[...]], axis=0)                   # (136, HW)

    # SEModule: AdaptiveAvgPool2d(1) -> Linear -> ReLU -> Linear -> Sigmoid -> scale.
    # Entirely VPU/XLU (broadcast-mul + reduces); exact sigmoid for the gate.
    y = jnp.mean(x, axis=1, keepdims=True)                                  # (136, 1)
    h = jnp.maximum(jnp.sum(w1_ref[...] * y, axis=0, keepdims=True)
                    + b1_ref[...], 0.0)                                     # (1, 8)
    z = jnp.sum(w2t_ref[...] * h, axis=1, keepdims=True) + b2_ref[...]      # (136, 1)
    g = 1.0 / (1.0 + jnp.exp(-z))
    xg = x * g                                                              # (136, HW)

    # fusion Conv2d(136 -> 64, kernel_size=1)
    fused = _dot(wct_ref[...], xg) + bc_ref[...]                            # (64, HW)

    # neighbour-shift validity masks on the HxW lane grid (shared by both deconvs).
    col = lax.broadcasted_iota(jnp.int32, (1, HW), 1)
    mj = (col % W) != (W - 1)            # x[i, j+1] in bounds
    mi = col < (HW - W)                  # x[i+1, j] in bounds
    mij = jnp.logical_and(mj, mi)

    def shifts(v):
        vj = jnp.where(mj, _shift_lanes(v, 1), 0.0)
        vi = jnp.where(mi, _shift_lanes(v, W), 0.0)
        vij = jnp.where(mij, _shift_lanes(v, W + 1), 0.0)
        return vj, vi, vij

    # ConvTranspose2d(64->32, 3, stride=2, padding=1, output_padding=1) + ReLU6 as a single
    # K-concatenated matmul.  Row block m = 2r+s of p1 is parity plane out1[2i+r, 2j+s].
    fj, fi, fij = shifts(fused)
    v1 = jnp.concatenate([fused, fj, fi, fij], axis=0)                      # (4*64, HW)
    p1 = jnp.clip(_dot(wd1_ref[...], v1) + bd1_ref[...], 0.0, 6.0)          # (4*32, HW)

    # ConvTranspose2d(32->16, ...) + ReLU6, evaluated in packed-parity space: lane block
    # ab = 2a+b of the (.., 4*HW) operands covers y1[2i+a, 2j+b] over the HxW base grid.
    pj, pi, pij = shifts(p1)

    def blk(t, k):                      # 32-channel parity block k = 2a+b
        return t[c_dec1 * k:c_dec1 * (k + 1), :]

    z0 = p1                                                                           # ab = 00
    z1 = jnp.concatenate([blk(p1, 1), blk(pj, 0), blk(p1, 3), blk(pj, 2)], axis=0)    # ab = 01
    z2 = jnp.concatenate([blk(p1, 2), blk(p1, 3), blk(pi, 0), blk(pi, 1)], axis=0)    # ab = 10
    z3 = jnp.concatenate([blk(p1, 3), blk(pj, 2), blk(pi, 1), blk(pij, 0)], axis=0)   # ab = 11
    zall = jnp.concatenate([z0, z1, z2, z3], axis=1)                        # (4*32, 4*HW)
    y2 = jnp.clip(_dot(wd2_ref[...], zall) + bd2_ref[...], 0.0, 6.0)        # (4*16, 4*HW)

    # Conv2d(16 -> 1, kernel_size=1) head + sigmoid; lane-dense (4, 4*HW) packed output.
    o = _dot(wh_ref[...], y2) + bh_ref[...]                                 # (4, 4*HW)
    o_ref[...] = pl.reciprocal(1.0 + jnp.exp(-o), approx=True)


# ----------------------------------------- weight packing -----------------------------------------
def _pack_deconv_matrix(w):
    """ConvTranspose2d(3x3, s=2, p=1, op=1) taps -> one (4*Cout, 4*Cin) packed/transposed matrix.

    Output row block m = 2r+s is parity plane out[2i+r, 2j+s]; input column blocks are the
    operands [x, x[i,j+1], x[i+1,j], x[i+1,j+1]] stacked along K:
      ee = w11.x                       eo = w12.x + w10.x01
      oe = w21.x + w01.x10             oo = w22.x + w20.x01 + w02.x10 + w00.x11
    """
    cin, cout = w.shape[2], w.shape[3]
    zero = jnp.zeros((cout, cin), w.dtype)

    def t(r, c):
        return w[r, c].T                          # (Cout, Cin)

    rows = [
        jnp.concatenate([t(1, 1), zero,    zero,    zero   ], axis=1),
        jnp.concatenate([t(1, 2), t(1, 0), zero,    zero   ], axis=1),
        jnp.concatenate([t(2, 1), zero,    t(0, 1), zero   ], axis=1),
        jnp.concatenate([t(2, 2), t(2, 0), t(0, 2), t(0, 0)], axis=1),
    ]
    return jnp.concatenate(rows, axis=0)          # (4*Cout, 4*Cin)


def _bcast_spec(shape):
    zeros = (0,) * len(shape)
    return pl.BlockSpec(shape, lambda b: zeros)


# ------------------------------------------- wiring -------------------------------------------
def init_params(key):
    ks = jax.random.split(key, 12)
    c = 112 + 24        # 136 fused channels
    r = c // 16         # SE reduction -> 8
    s = 0.2
    return {
        "se_w1": s * jax.random.normal(ks[0], (c, r), jnp.float32),     # Linear(136, 8)
        "se_b1": s * jax.random.normal(ks[1], (1, r), jnp.float32),
        "se_w2": s * jax.random.normal(ks[2], (r, c), jnp.float32),     # Linear(8, 136)
        "se_b2": s * jax.random.normal(ks[3], (1, c), jnp.float32),
        "fuse_w": s * jax.random.normal(ks[4], (c, 64), jnp.float32),   # Conv2d(136, 64, 1)
        "fuse_b": s * jax.random.normal(ks[5], (1, 64), jnp.float32),
        "dc1_w": s * jax.random.normal(ks[6], (3, 3, 64, 32), jnp.float32),  # ConvT(64, 32, 3)
        "dc1_b": s * jax.random.normal(ks[7], (1, 32), jnp.float32),
        "dc2_w": s * jax.random.normal(ks[8], (3, 3, 32, 16), jnp.float32),  # ConvT(32, 16, 3)
        "dc2_b": s * jax.random.normal(ks[9], (1, 16), jnp.float32),
        "head_w": s * jax.random.normal(ks[10], (16, 1), jnp.float32),  # Conv2d(16, 1, 1)
        "head_b": s * jax.random.normal(ks[11], (1, 1), jnp.float32),
    }


def dual_stream_net_forward(s_feat_nchw, d_feat_nchw, p):
    B, Cs, H, W = s_feat_nchw.shape
    Cd = d_feat_nchw.shape[1]
    HW = H * W
    c1 = p["dc1_w"].shape[-1]                                     # 32 deconv1 output channels

    # channel-major (C, H*W) views of the NCHW encoder features: reshape only, no XLA transpose.
    s_cm = s_feat_nchw.reshape(B, Cs, HW)
    d_cm = d_feat_nchw.reshape(B, Cd, HW)

    # pack weights (transposed / parity-packed; tiny XLA ops).
    wd1 = _pack_deconv_matrix(p["dc1_w"])                         # (128, 256)
    bd1 = jnp.tile(p["dc1_b"].T, (4, 1))                          # (128, 1)
    wd2 = _pack_deconv_matrix(p["dc2_w"])                         # (64, 128)
    bd2 = jnp.tile(p["dc2_b"].T, (4, 1))                          # (64, 1)
    wh = jnp.kron(jnp.eye(4, dtype=p["head_w"].dtype), p["head_w"].T)   # (4, 64) block-diag head
    bh = jnp.tile(p["head_b"], (4, 1))                            # (4, 1)

    weights = (p["se_w1"], p["se_b1"], p["se_w2"].T, p["se_b2"].T,
               p["fuse_w"].T, p["fuse_b"].T, wd1, bd1, wd2, bd2, wh, bh)

    kern = functools.partial(_fused_kernel, spatial=(H, W), c_dec1=c1)
    packed = pl.pallas_call(
        kern,
        out_shape=jax.ShapeDtypeStruct((B, 4, 4 * HW), jnp.float32),
        grid=(B,),
        in_specs=[pl.BlockSpec((None, Cs, HW), lambda b: (b, 0, 0)),
                  pl.BlockSpec((None, Cd, HW), lambda b: (b, 0, 0))]
                 + [_bcast_spec(w.shape) for w in weights],
        out_specs=pl.BlockSpec((None, 4, 4 * HW), lambda b: (b, 0, 0)),
        compiler_params=pltpu.CompilerParams(dimension_semantics=("parallel",)),
    )(s_cm, d_cm, *weights)

    # decode: packed[b, 2r+s, HW*(2a+b) + W*i + j] -> out[b, 0, 4i+2a+r, 4j+2b+s]  (tiny XLA glue)
    out = (packed.reshape(B, 2, 2, 2, 2, H, W)
           .transpose(0, 5, 3, 1, 6, 4, 2)
           .reshape(B, 1, 4 * H, 4 * W))
    return out


# -------------------------------- pure-JAX reference for checking --------------------------------
def _sigmoid_ref(v):
    return 1.0 / (1.0 + jnp.exp(-v))


def reference_forward(s_feat_nchw, d_feat_nchw, p):
    s = jnp.transpose(s_feat_nchw, (0, 2, 3, 1))
    d = jnp.transpose(d_feat_nchw, (0, 2, 3, 1))
    x = jnp.concatenate([s, d], axis=-1)
    y = jnp.mean(x, axis=(1, 2))
    h = jnp.maximum(jnp.dot(y, p["se_w1"], precision=_HIGHEST) + p["se_b1"][0], 0.0)
    g = _sigmoid_ref(jnp.dot(h, p["se_w2"], precision=_HIGHEST) + p["se_b2"][0])
    xs = x * g[:, None, None, :]
    fused = jnp.einsum("bhwc,co->bhwo", xs, p["fuse_w"], precision=_HIGHEST) + p["fuse_b"][0]

    def deconv_ref(v, w, b):
        wf = w[::-1, ::-1, :, :]
        out = lax.conv_general_dilated(v, wf, window_strides=(1, 1),
                                       padding=[(1, 2), (1, 2)], lhs_dilation=(2, 2),
                                       dimension_numbers=("NHWC", "HWIO", "NHWC"),
                                       precision=_HIGHEST)
        return out + b[0]

    y1 = jnp.clip(deconv_ref(fused, p["dc1_w"], p["dc1_b"]), 0.0, 6.0)
    y2 = jnp.clip(deconv_ref(y1, p["dc2_w"], p["dc2_b"]), 0.0, 6.0)
    o = _sigmoid_ref(jnp.einsum("bhwc,co->bhwo", y2, p["head_w"], precision=_HIGHEST)
                     + p["head_b"][0])
    return jnp.transpose(o, (0, 3, 1, 2))


if __name__ == "__main__":
    key = jax.random.PRNGKey(0)
    k_s, k_d, k_p = jax.random.split(key, 3)
    B, Hf, Wf = 2, 8, 8
    # encoder output feature maps (NCHW, like the PyTorch encoders would emit)
    s_feat = jax.random.normal(k_s, (B, 24, Hf, Wf), jnp.float32)
    d_feat = jax.random.normal(k_d, (B, 112, Hf, Wf), jnp.float32)
    params = init_params(k_p)

    fwd = jax.jit(dual_stream_net_forward)
    out = jax.block_until_ready(fwd(s_feat, d_feat, params))
    ref = jax.block_until_ready(reference_forward(s_feat, d_feat, params))
    assert out.shape == (B, 1, 4 * Hf, 4 * Wf), out.shape
    # default MXU precision (bf16 passes) + approx-reciprocal output sigmoid -> loose tolerance;
    # structural errors would be O(0.1) on sigmoid outputs.  SE gate uses exact sigmoid.
    np.testing.assert_allclose(np.asarray(out), np.asarray(ref), rtol=2e-2, atol=2e-2)
    print("KERNEL_OK")
</pallas_src>

<mosaic_0001>
module attributes {stable_mosaic.version = 11 : i64} {
  func.func @_fused_kernel(%arg0: i32, %arg1: memref<1x24x64xf32, #tpu.memory_space<vmem>>, %arg2: memref<1x112x64xf32, #tpu.memory_space<vmem>>, %arg3: memref<136x8xf32, #tpu.memory_space<vmem>>, %arg4: memref<1x8xf32, #tpu.memory_space<vmem>>, %arg5: memref<136x8xf32, #tpu.memory_space<vmem>>, %arg6: memref<136x1xf32, #tpu.memory_space<vmem>>, %arg7: memref<64x136xf32, #tpu.memory_space<vmem>>, %arg8: memref<64x1xf32, #tpu.memory_space<vmem>>, %arg9: memref<128x256xf32, #tpu.memory_space<vmem>>, %arg10: memref<128x1xf32, #tpu.memory_space<vmem>>, %arg11: memref<64x128xf32, #tpu.memory_space<vmem>>, %arg12: memref<64x1xf32, #tpu.memory_space<vmem>>, %arg13: memref<4x64xf32, #tpu.memory_space<vmem>>, %arg14: memref<4x1xf32, #tpu.memory_space<vmem>>, %arg15: memref<1x4x256xf32, #tpu.memory_space<vmem>>) attributes {dimension_semantics = [#tpu.dimension_semantics<parallel>], iteration_bounds = array<i64: 2>, scalar_prefetch = 0 : i64, scratch_operands = 0 : i64, tpu.core_type = #tpu.core_type<tc>, window_params = [{transform_indices = @transform_0, window_bounds = array<i64: 1, 24, 64>}, {transform_indices = @transform_1, window_bounds = array<i64: 1, 112, 64>}, {pipeline_mode = #tpu.pipeline_mode<synchronous>, transform_indices = @transform_2, window_bounds = array<i64: 136, 8>}, {pipeline_mode = #tpu.pipeline_mode<synchronous>, transform_indices = @transform_3, window_bounds = array<i64: 1, 8>}, {pipeline_mode = #tpu.pipeline_mode<synchronous>, transform_indices = @transform_4, window_bounds = array<i64: 136, 8>}, {pipeline_mode = #tpu.pipeline_mode<synchronous>, transform_indices = @transform_5, window_bounds = array<i64: 136, 1>}, {pipeline_mode = #tpu.pipeline_mode<synchronous>, transform_indices = @transform_6, window_bounds = array<i64: 64, 136>}, {pipeline_mode = #tpu.pipeline_mode<synchronous>, transform_indices = @transform_7, window_bounds = array<i64: 64, 1>}, {pipeline_mode = #tpu.pipeline_mode<synchronous>, transform_indices = @transform_8, window_bounds = array<i64: 128, 256>}, {pipeline_mode = #tpu.pipeline_mode<synchronous>, transform_indices = @transform_9, window_bounds = array<i64: 128, 1>}, {pipeline_mode = #tpu.pipeline_mode<synchronous>, transform_indices = @transform_10, window_bounds = array<i64: 64, 128>}, {pipeline_mode = #tpu.pipeline_mode<synchronous>, transform_indices = @transform_11, window_bounds = array<i64: 64, 1>}, {pipeline_mode = #tpu.pipeline_mode<synchronous>, transform_indices = @transform_12, window_bounds = array<i64: 4, 64>}, {pipeline_mode = #tpu.pipeline_mode<synchronous>, transform_indices = @transform_13, window_bounds = array<i64: 4, 1>}, {transform_indices = @transform_14, window_bounds = array<i64: 1, 4, 256>}]} {
    %c0 = arith.constant 0 : index
    %c0_0 = arith.constant 0 : index
    %c0_1 = arith.constant 0 : index
    %0 = vector.load %arg1[%c0, %c0_0, %c0_1] : memref<1x24x64xf32, #tpu.memory_space<vmem>>, vector<1x24x64xf32>
    %1 = vector.shape_cast %0 : vector<1x24x64xf32> to vector<24x64xf32>
    %c0_2 = arith.constant 0 : index
    %c0_3 = arith.constant 0 : index
    %c0_4 = arith.constant 0 : index
    %2 = vector.load %arg2[%c0_2, %c0_3, %c0_4] : memref<1x112x64xf32, #tpu.memory_space<vmem>>, vector<1x112x64xf32>
    %3 = vector.shape_cast %2 : vector<1x112x64xf32> to vector<112x64xf32>
    %4 = tpu.concatenate %1, %3 in 0 : vector<24x64xf32>, vector<112x64xf32> -> vector<136x64xf32>
    %cst = arith.constant dense<0.000000e+00> : vector<136xf32>
    %5 = vector.multi_reduction <add>, %4, %cst [1] : vector<136x64xf32> to vector<136xf32>
    %6 = vector.shape_cast %5 : vector<136xf32> to vector<136x1xf32>
    %cst_5 = arith.constant 6.400000e+01 : f32
    %7 = vector.broadcast %cst_5 : f32 to vector<136x1xf32>
    %8 = arith.divf %6, %7 : vector<136x1xf32>
    %c0_6 = arith.constant 0 : index
    %c0_7 = arith.constant 0 : index
    %9 = vector.load %arg3[%c0_6, %c0_7] : memref<136x8xf32, #tpu.memory_space<vmem>>, vector<136x8xf32>
    %10 = vector.broadcast %8 : vector<136x1xf32> to vector<136x8xf32>
    %11 = arith.mulf %9, %10 : vector<136x8xf32>
    %cst_8 = arith.constant dense<0.000000e+00> : vector<8xf32>
    %12 = vector.multi_reduction <add>, %11, %cst_8 [0] : vector<136x8xf32> to vector<8xf32>
    %13 = vector.shape_cast %12 : vector<8xf32> to vector<1x8xf32>
    %c0_9 = arith.constant 0 : index
    %c0_10 = arith.constant 0 : index
    %14 = vector.load %arg4[%c0_9, %c0_10] : memref<1x8xf32, #tpu.memory_space<vmem>>, vector<1x8xf32>
    %15 = arith.addf %13, %14 : vector<1x8xf32>
    %cst_11 = arith.constant 0.000000e+00 : f32
    %16 = vector.broadcast %cst_11 : f32 to vector<1x8xf32>
    %17 = arith.maximumf %15, %16 : vector<1x8xf32>
    %c0_12 = arith.constant 0 : index
    %c0_13 = arith.constant 0 : index
    %18 = vector.load %arg5[%c0_12, %c0_13] : memref<136x8xf32, #tpu.memory_space<vmem>>, vector<136x8xf32>
    %19 = vector.broadcast %17 : vector<1x8xf32> to vector<136x8xf32>
    %20 = arith.mulf %18, %19 : vector<136x8xf32>
    %cst_14 = arith.constant dense<0.000000e+00> : vector<136xf32>
    %21 = vector.multi_reduction <add>, %20, %cst_14 [1] : vector<136x8xf32> to vector<136xf32>
    %22 = vector.shape_cast %21 : vector<136xf32> to vector<136x1xf32>
    %c0_15 = arith.constant 0 : index
    %c0_16 = arith.constant 0 : index
    %23 = vector.load %arg6[%c0_15, %c0_16] : memref<136x1xf32, #tpu.memory_space<vmem>>, vector<136x1xf32>
    %24 = arith.addf %22, %23 : vector<136x1xf32>
    %cst_17 = arith.constant 0.000000e+00 : f32
    %25 = vector.broadcast %cst_17 : f32 to vector<136x1xf32>
    %26 = arith.subf %25, %24 : vector<136x1xf32>
    %27 = math.exp %26 : vector<136x1xf32>
    %cst_18 = arith.constant 1.000000e+00 : f32
    %28 = vector.broadcast %cst_18 : f32 to vector<136x1xf32>
    %29 = arith.addf %28, %27 : vector<136x1xf32>
    %cst_19 = arith.constant 1.000000e+00 : f32
    %30 = vector.broadcast %cst_19 : f32 to vector<136x1xf32>
    %31 = arith.divf %30, %29 : vector<136x1xf32>
    %32 = vector.broadcast %31 : vector<136x1xf32> to vector<136x64xf32>
    %33 = arith.mulf %4, %32 : vector<136x64xf32>
    %c0_20 = arith.constant 0 : index
    %c0_21 = arith.constant 0 : index
    %34 = vector.load %arg7[%c0_20, %c0_21] : memref<64x136xf32, #tpu.memory_space<vmem>>, vector<64x136xf32>
    %cst_22 = arith.constant dense<0.000000e+00> : vector<64x64xf32>
    %35 = tpu.matmul %34, %33, %cst_22 {dimension_numbers = #tpu.dot_dimension_numbers<[1], [0], [0], [1], [0, 0, 1, 1], [], []>} : vector<64x136xf32>, vector<136x64xf32>, vector<64x64xf32> -> vector<64x64xf32>
    %c0_23 = arith.constant 0 : index
    %c0_24 = arith.constant 0 : index
    %36 = vector.load %arg8[%c0_23, %c0_24] : memref<64x1xf32, #tpu.memory_space<vmem>>, vector<64x1xf32>
    %37 = vector.broadcast %36 : vector<64x1xf32> to vector<64x64xf32>
    %38 = arith.addf %35, %37 : vector<64x64xf32>
    %39 = tpu.iota {dimensions = array<i32: 1>} : vector<1x64xi32>
    %c8_i32 = arith.constant 8 : i32
    %c0_i32 = arith.constant 0 : i32
    %40 = arith.cmpi eq, %c8_i32, %c0_i32 : i32
    %c1_i32 = arith.constant 1 : i32
    %41 = arith.select %40, %c1_i32, %c8_i32 : i32
    %42 = vector.broadcast %41 : i32 to vector<1x64xi32>
    %43 = arith.remsi %39, %42 : vector<1x64xi32>
    %c0_i32_25 = arith.constant 0 : i32
    %44 = vector.broadcast %c0_i32_25 : i32 to vector<1x64xi32>
    %45 = arith.cmpi ne, %43, %44 : vector<1x64xi32>
    %c0_i32_26 = arith.constant 0 : i32
    %46 = vector.broadcast %c0_i32_26 : i32 to vector<1x64xi32>
    %47 = arith.cmpi slt, %43, %46 : vector<1x64xi32>
    %c0_i32_27 = arith.constant 0 : i32
    %48 = arith.cmpi slt, %41, %c0_i32_27 : i32
    %49 = vector.broadcast %48 : i1 to vector<1x64xi1>
    %50 = vector.broadcast %49 : vector<1x64xi1> to vector<1x64xi1>
    %51 = arith.xori %47, %50 : vector<1x64xi1>
    %52 = arith.andi %51, %45 : vector<1x64xi1>
    %53 = vector.broadcast %41 : i32 to vector<1x64xi32>
    %54 = arith.addi %43, %53 : vector<1x64xi32>
    %55 = arith.select %52, %54, %43 : vector<1x64xi1>, vector<1x64xi32>
    %c7_i32 = arith.constant 7 : i32
    %56 = vector.broadcast %c7_i32 : i32 to vector<1x64xi32>
    %57 = arith.cmpi ne, %55, %56 : vector<1x64xi32>
    %c56_i32 = arith.constant 56 : i32
    %58 = vector.broadcast %c56_i32 : i32 to vector<1x64xi32>
    %59 = arith.cmpi slt, %39, %58 : vector<1x64xi32>
    %60 = arith.andi %57, %59 : vector<1x64xi1>
    %cst_28 = arith.constant 0.000000e+00 : f32
    %61 = vector.broadcast %cst_28 : f32 to vector<64x1xf32>
    %62 = vector.extract_strided_slice %38 {offsets = [0, 1], sizes = [64, 63], strides = [1, 1]} : vector<64x64xf32> to vector<64x63xf32>
    %63 = tpu.concatenate %62, %61 in 1 : vector<64x63xf32>, vector<64x1xf32> -> vector<64x64xf32>
    %cst_29 = arith.constant 0.000000e+00 : f32
    %64 = vector.shape_cast %57 : vector<1x64xi1> to vector<1x64xi1>
    %65 = vector.broadcast %64 : vector<1x64xi1> to vector<64x64xi1>
    %66 = vector.broadcast %cst_29 : f32 to vector<64x64xf32>
    %67 = arith.select %65, %63, %66 : vector<64x64xi1>, vector<64x64xf32>
    %cst_30 = arith.constant 0.000000e+00 : f32
    %68 = vector.broadcast %cst_30 : f32 to vector<64x8xf32>
    %69 = vector.extract_strided_slice %38 {offsets = [0, 8], sizes = [64, 56], strides = [1, 1]} : vector<64x64xf32> to vector<64x56xf32>
    %70 = tpu.concatenate %69, %68 in 1 : vector<64x56xf32>, vector<64x8xf32> -> vector<64x64xf32>
    %cst_31 = arith.constant 0.000000e+00 : f32
    %71 = vector.shape_cast %59 : vector<1x64xi1> to vector<1x64xi1>
    %72 = vector.broadcast %71 : vector<1x64xi1> to vector<64x64xi1>
    %73 = vector.broadcast %cst_31 : f32 to vector<64x64xf32>
    %74 = arith.select %72, %70, %73 : vector<64x64xi1>, vector<64x64xf32>
    %cst_32 = arith.constant 0.000000e+00 : f32
    %75 = vector.broadcast %cst_32 : f32 to vector<64x9xf32>
    %76 = vector.extract_strided_slice %38 {offsets = [0, 9], sizes = [64, 55], strides = [1, 1]} : vector<64x64xf32> to vector<64x55xf32>
    %77 = tpu.concatenate %76, %75 in 1 : vector<64x55xf32>, vector<64x9xf32> -> vector<64x64xf32>
    %cst_33 = arith.constant 0.000000e+00 : f32
    %78 = vector.shape_cast %60 : vector<1x64xi1> to vector<1x64xi1>
    %79 = vector.broadcast %78 : vector<1x64xi1> to vector<64x64xi1>
    %80 = vector.broadcast %cst_33 : f32 to vector<64x64xf32>
    %81 = arith.select %79, %77, %80 : vector<64x64xi1>, vector<64x64xf32>
    %82 = tpu.concatenate %38, %67, %74, %81 in 0 : vector<64x64xf32>, vector<64x64xf32>, vector<64x64xf32>, vector<64x64xf32> -> vector<256x64xf32>
    %c0_34 = arith.constant 0 : index
    %c0_35 = arith.constant 0 : index
    %83 = vector.load %arg9[%c0_34, %c0_35] : memref<128x256xf32, #tpu.memory_space<vmem>>, vector<128x256xf32>
    %cst_36 = arith.constant dense<0.000000e+00> : vector<128x64xf32>
    %84 = tpu.matmul %83, %82, %cst_36 {dimension_numbers = #tpu.dot_dimension_numbers<[1], [0], [0], [1], [0, 0, 1, 1], [], []>} : vector<128x256xf32>, vector<256x64xf32>, vector<128x64xf32> -> vector<128x64xf32>
    %c0_37 = arith.constant 0 : index
    %c0_38 = arith.constant 0 : index
    %85 = vector.load %arg10[%c0_37, %c0_38] : memref<128x1xf32, #tpu.memory_space<vmem>>, vector<128x1xf32>
    %86 = vector.broadcast %85 : vector<128x1xf32> to vector<128x64xf32>
    %87 = arith.addf %84, %86 : vector<128x64xf32>
    %cst_39 = arith.constant 0.000000e+00 : f32
    %cst_40 = arith.constant 6.000000e+00 : f32
    %88 = vector.broadcast %cst_39 : f32 to vector<128x64xf32>
    %89 = arith.maximumf %88, %87 : vector<128x64xf32>
    %90 = vector.broadcast %cst_40 : f32 to vector<128x64xf32>
    %91 = arith.minimumf %90, %89 : vector<128x64xf32>
    %cst_41 = arith.constant 0.000000e+00 : f32
    %92 = vector.broadcast %cst_41 : f32 to vector<128x1xf32>
    %93 = vector.extract_strided_slice %91 {offsets = [0, 1], sizes = [128, 63], strides = [1, 1]} : vector<128x64xf32> to vector<128x63xf32>
    %94 = tpu.concatenate %93, %92 in 1 : vector<128x63xf32>, vector<128x1xf32> -> vector<128x64xf32>
    %cst_42 = arith.constant 0.000000e+00 : f32
    %95 = vector.shape_cast %57 : vector<1x64xi1> to vector<1x64xi1>
    %96 = vector.broadcast %95 : vector<1x64xi1> to vector<128x64xi1>
    %97 = vector.broadcast %cst_42 : f32 to vector<128x64xf32>
    %98 = arith.select %96, %94, %97 : vector<128x64xi1>, vector<128x64xf32>
    %cst_43 = arith.constant 0.000000e+00 : f32
    %99 = vector.broadcast %cst_43 : f32 to vector<128x8xf32>
    %100 = vector.extract_strided_slice %91 {offsets = [0, 8], sizes = [128, 56], strides = [1, 1]} : vector<128x64xf32> to vector<128x56xf32>
    %101 = tpu.concatenate %100, %99 in 1 : vector<128x56xf32>, vector<128x8xf32> -> vector<128x64xf32>
    %cst_44 = arith.constant 0.000000e+00 : f32
    %102 = vector.shape_cast %59 : vector<1x64xi1> to vector<1x64xi1>
    %103 = vector.broadcast %102 : vector<1x64xi1> to vector<128x64xi1>
    %104 = vector.broadcast %cst_44 : f32 to vector<128x64xf32>
    %105 = arith.select %103, %101, %104 : vector<128x64xi1>, vector<128x64xf32>
    %cst_45 = arith.constant 0.000000e+00 : f32
    %106 = vector.broadcast %cst_45 : f32 to vector<128x9xf32>
    %107 = vector.extract_strided_slice %91 {offsets = [0, 9], sizes = [128, 55], strides = [1, 1]} : vector<128x64xf32> to vector<128x55xf32>
    %108 = tpu.concatenate %107, %106 in 1 : vector<128x55xf32>, vector<128x9xf32> -> vector<128x64xf32>
    %cst_46 = arith.constant 0.000000e+00 : f32
    %109 = vector.shape_cast %60 : vector<1x64xi1> to vector<1x64xi1>
    %110 = vector.broadcast %109 : vector<1x64xi1> to vector<128x64xi1>
    %111 = vector.broadcast %cst_46 : f32 to vector<128x64xf32>
    %112 = arith.select %110, %108, %111 : vector<128x64xi1>, vector<128x64xf32>
    %113 = vector.extract_strided_slice %91 {offsets = [32, 0], sizes = [32, 64], strides = [1, 1]} : vector<128x64xf32> to vector<32x64xf32>
    %114 = vector.extract_strided_slice %98 {offsets = [0, 0], sizes = [32, 64], strides = [1, 1]} : vector<128x64xf32> to vector<32x64xf32>
    %115 = vector.extract_strided_slice %91 {offsets = [96, 0], sizes = [32, 64], strides = [1, 1]} : vector<128x64xf32> to vector<32x64xf32>
    %116 = vector.extract_strided_slice %98 {offsets = [64, 0], sizes = [32, 64], strides = [1, 1]} : vector<128x64xf32> to vector<32x64xf32>
    %117 = tpu.concatenate %113, %114, %115, %116 in 0 : vector<32x64xf32>, vector<32x64xf32>, vector<32x64xf32>, vector<32x64xf32> -> vector<128x64xf32>
    %118 = vector.extract_strided_slice %91 {offsets = [64, 0], sizes = [32, 64], strides = [1, 1]} : vector<128x64xf32> to vector<32x64xf32>
    %119 = vector.extract_strided_slice %91 {offsets = [96, 0], sizes = [32, 64], strides = [1, 1]} : vector<128x64xf32> to vector<32x64xf32>
    %120 = vector.extract_strided_slice %105 {offsets = [0, 0], sizes = [32, 64], strides = [1, 1]} : vector<128x64xf32> to vector<32x64xf32>
    %121 = vector.extract_strided_slice %105 {offsets = [32, 0], sizes = [32, 64], strides = [1, 1]} : vector<128x64xf32> to vector<32x64xf32>
    %122 = tpu.concatenate %118, %119, %120, %121 in 0 : vector<32x64xf32>, vector<32x64xf32>, vector<32x64xf32>, vector<32x64xf32> -> vector<128x64xf32>
    %123 = vector.extract_strided_slice %91 {offsets = [96, 0], sizes = [32, 64], strides = [1, 1]} : vector<128x64xf32> to vector<32x64xf32>
    %124 = vector.extract_strided_slice %98 {offsets = [64, 0], sizes = [32, 64], strides = [1, 1]} : vector<128x64xf32> to vector<32x64xf32>
    %125 = vector.extract_strided_slice %105 {offsets = [32, 0], sizes = [32, 64], strides = [1, 1]} : vector<128x64xf32> to vector<32x64xf32>
    %126 = vector.extract_strided_slice %112 {offsets = [0, 0], sizes = [32, 64], strides = [1, 1]} : vector<128x64xf32> to vector<32x64xf32>
    %127 = tpu.concatenate %123, %124, %125, %126 in 0 : vector<32x64xf32>, vector<32x64xf32>, vector<32x64xf32>, vector<32x64xf32> -> vector<128x64xf32>
    %128 = tpu.concatenate %91, %117, %122, %127 in 1 : vector<128x64xf32>, vector<128x64xf32>, vector<128x64xf32>, vector<128x64xf32> -> vector<128x256xf32>
    %c0_47 = arith.constant 0 : index
    %c0_48 = arith.constant 0 : index
    %129 = vector.load %arg11[%c0_47, %c0_48] : memref<64x128xf32, #tpu.memory_space<vmem>>, vector<64x128xf32>
    %cst_49 = arith.constant dense<0.000000e+00> : vector<64x256xf32>
    %130 = tpu.matmul %129, %128, %cst_49 {dimension_numbers = #tpu.dot_dimension_numbers<[1], [0], [0], [1], [0, 0, 1, 1], [], []>} : vector<64x128xf32>, vector<128x256xf32>, vector<64x256xf32> -> vector<64x256xf32>
    %c0_50 = arith.constant 0 : index
    %c0_51 = arith.constant 0 : index
    %131 = vector.load %arg12[%c0_50, %c0_51] : memref<64x1xf32, #tpu.memory_space<vmem>>, vector<64x1xf32>
    %132 = vector.broadcast %131 : vector<64x1xf32> to vector<64x256xf32>
    %133 = arith.addf %130, %132 : vector<64x256xf32>
    %cst_52 = arith.constant 0.000000e+00 : f32
    %cst_53 = arith.constant 6.000000e+00 : f32
    %134 = vector.broadcast %cst_52 : f32 to vector<64x256xf32>
    %135 = arith.maximumf %134, %133 : vector<64x256xf32>
    %136 = vector.broadcast %cst_53 : f32 to vector<64x256xf32>
    %137 = arith.minimumf %136, %135 : vector<64x256xf32>
    %c0_54 = arith.constant 0 : index
    %c0_55 = arith.constant 0 : index
    %138 = vector.load %arg13[%c0_54, %c0_55] : memref<4x64xf32, #tpu.memory_space<vmem>>, vector<4x64xf32>
    %cst_56 = arith.constant dense<0.000000e+00> : vector<4x256xf32>
    %139 = tpu.matmul %138, %137, %cst_56 {dimension_numbers = #tpu.dot_dimension_numbers<[1], [0], [0], [1], [0, 0, 1, 1], [], []>} : vector<4x64xf32>, vector<64x256xf32>, vector<4x256xf32> -> vector<4x256xf32>
    %c0_57 = arith.constant 0 : index
    %c0_58 = arith.constant 0 : index
    %140 = vector.load %arg14[%c0_57, %c0_58] : memref<4x1xf32, #tpu.memory_space<vmem>>, vector<4x1xf32>
    %141 = vector.broadcast %140 : vector<4x1xf32> to vector<4x256xf32>
    %142 = arith.addf %139, %141 : vector<4x256xf32>
    %cst_59 = arith.constant 0.000000e+00 : f32
    %143 = vector.broadcast %cst_59 : f32 to vector<4x256xf32>
    %144 = arith.subf %143, %142 : vector<4x256xf32>
    %145 = math.exp %144 : vector<4x256xf32>
    %cst_60 = arith.constant 1.000000e+00 : f32
    %146 = vector.broadcast %cst_60 : f32 to vector<4x256xf32>
    %147 = arith.addf %146, %145 : vector<4x256xf32>
    %148 = tpu.reciprocal %147 {approx = true} : vector<4x256xf32> -> vector<4x256xf32>
    %c0_61 = arith.constant 0 : index
    %c0_62 = arith.constant 0 : index
    %c0_63 = arith.constant 0 : index
    %149 = vector.load %arg15[%c0_61, %c0_62, %c0_63] : memref<1x4x256xf32, #tpu.memory_space<vmem>>, vector<1x4x256xf32>
    %150 = vector.shape_cast %149 : vector<1x4x256xf32> to vector<4x256xf32>
    %151 = vector.shape_cast %148 : vector<4x256xf32> to vector<1x4x256xf32>
    tpu.vector_store %arg15[%c0_61, %c0_62, %c0_63], %151 {strides = array<i32>} : memref<1x4x256xf32, #tpu.memory_space<vmem>>, vector<1x4x256xf32>,
    return
  }
  func.func @transform_0(%arg0: i32) -> (i32, i32, i32) {
    %c0_i32 = arith.constant 0 : i32
    %c0_i32_0 = arith.constant 0 : i32
    %c0_i32_1 = arith.constant 0 : i32
    return %arg0, %c0_i32, %c0_i32_0 : i32, i32, i32
  }
  func.func @transform_1(%arg0: i32) -> (i32, i32, i32) {
    %c0_i32 = arith.constant 0 : i32
    %c0_i32_0 = arith.constant 0 : i32
    %c0_i32_1 = arith.constant 0 : i32
    return %arg0, %c0_i32, %c0_i32_0 : i32, i32, i32
  }
  func.func @transform_2(%arg0: i32) -> (i32, i32) {
    %c0_i32 = arith.constant 0 : i32
    %c0_i32_0 = arith.constant 0 : i32
    %c0_i32_1 = arith.constant 0 : i32
    return %c0_i32, %c0_i32_0 : i32, i32
  }
  func.func @transform_3(%arg0: i32) -> (i32, i32) {
    %c0_i32 = arith.constant 0 : i32
    %c0_i32_0 = arith.constant 0 : i32
    %c0_i32_1 = arith.constant 0 : i32
    return %c0_i32, %c0_i32_0 : i32, i32
  }
  func.func @transform_4(%arg0: i32) -> (i32, i32) {
    %c0_i32 = arith.constant 0 : i32
    %c0_i32_0 = arith.constant 0 : i32
    %c0_i32_1 = arith.constant 0 : i32
    return %c0_i32, %c0_i32_0 : i32, i32
  }
  func.func @transform_5(%arg0: i32) -> (i32, i32) {
    %c0_i32 = arith.constant 0 : i32
    %c0_i32_0 = arith.constant 0 : i32
    %c0_i32_1 = arith.constant 0 : i32
    return %c0_i32, %c0_i32_0 : i32, i32
  }
  func.func @transform_6(%arg0: i32) -> (i32, i32) {
    %c0_i32 = arith.constant 0 : i32
    %c0_i32_0 = arith.constant 0 : i32
    %c0_i32_1 = arith.constant 0 : i32
    return %c0_i32, %c0_i32_0 : i32, i32
  }
  func.func @transform_7(%arg0: i32) -> (i32, i32) {
    %c0_i32 = arith.constant 0 : i32
    %c0_i32_0 = arith.constant 0 : i32
    %c0_i32_1 = arith.constant 0 : i32
    return %c0_i32, %c0_i32_0 : i32, i32
  }
  func.func @transform_8(%arg0: i32) -> (i32, i32) {
    %c0_i32 = arith.constant 0 : i32
    %c0_i32_0 = arith.constant 0 : i32
    %c0_i32_1 = arith.constant 0 : i32
    return %c0_i32, %c0_i32_0 : i32, i32
  }
  func.func @transform_9(%arg0: i32) -> (i32, i32) {
    %c0_i32 = arith.constant 0 : i32
    %c0_i32_0 = arith.constant 0 : i32
    %c0_i32_1 = arith.constant 0 : i32
    return %c0_i32, %c0_i32_0 : i32, i32
  }
  func.func @transform_10(%arg0: i32) -> (i32, i32) {
    %c0_i32 = arith.constant 0 : i32
    %c0_i32_0 = arith.constant 0 : i32
    %c0_i32_1 = arith.constant 0 : i32
    return %c0_i32, %c0_i32_0 : i32, i32
  }
  func.func @transform_11(%arg0: i32) -> (i32, i32) {
    %c0_i32 = arith.constant 0 : i32
    %c0_i32_0 = arith.constant 0 : i32
    %c0_i32_1 = arith.constant 0 : i32
    return %c0_i32, %c0_i32_0 : i32, i32
  }
  func.func @transform_12(%arg0: i32) -> (i32, i32) {
    %c0_i32 = arith.constant 0 : i32
    %c0_i32_0 = arith.constant 0 : i32
    %c0_i32_1 = arith.constant 0 : i32
    return %c0_i32, %c0_i32_0 : i32, i32
  }
  func.func @transform_13(%arg0: i32) -> (i32, i32) {
    %c0_i32 = arith.constant 0 : i32
    %c0_i32_0 = arith.constant 0 : i32
    %c0_i32_1 = arith.constant 0 : i32
    return %c0_i32, %c0_i32_0 : i32, i32
  }
  func.func @transform_14(%arg0: i32) -> (i32, i32, i32) {
    %c0_i32 = arith.constant 0 : i32
    %c0_i32_0 = arith.constant 0 : i32
    %c0_i32_1 = arith.constant 0 : i32
    return %arg0, %c0_i32, %c0_i32_0 : i32, i32, i32
  }
}

</mosaic_0001>

<llo_original>
// kernel: dual_stream_net_forward.1
$region0: #{dual_stream_net_forward.1}
  #allocation0 [shape = 'u32[]', space=smem, size = 0x4, offset = 0x4, fixed_abs, tag = 'smem constant byte address 0x4 - core index']
  #allocation1 [shape = 'u32[144,128]{1,0:T(1,128)}', space=vmem, size = 0x12000, scoped, tag = 'internal scratch']
  %s0 = inlined_call_operand.vmem [shape: f32[2,24,64], index: 0, kind: input, shape index: {}]
  %s1 = inlined_call_operand.vmem [shape: f32[2,112,64], index: 1, kind: input, shape index: {}]
  %s2 = inlined_call_operand.vmem [shape: f32[136,8], index: 2, kind: input, shape index: {}]
  %s3 = inlined_call_operand.vmem [shape: f32[1,8], index: 3, kind: input, shape index: {}]
  %s4 = inlined_call_operand.vmem [shape: f32[136,8], index: 4, kind: input, shape index: {}]
  %s5 = inlined_call_operand.vmem [shape: f32[136,1], index: 5, kind: input, shape index: {}]
  %s6 = inlined_call_operand.vmem [shape: f32[64,136], index: 6, kind: input, shape index: {}]
  %s7 = inlined_call_operand.vmem [shape: f32[64,1], index: 7, kind: input, shape index: {}]
  %s8 = inlined_call_operand.vmem [shape: f32[128,256], index: 8, kind: input, shape index: {}]
  %s9 = inlined_call_operand.vmem [shape: f32[128,1], index: 9, kind: input, shape index: {}]
  %s10 = inlined_call_operand.vmem [shape: f32[64,128], index: 10, kind: input, shape index: {}]
  %s11 = inlined_call_operand.vmem [shape: f32[64,1], index: 11, kind: input, shape index: {}]
  %s12 = inlined_call_operand.vmem [shape: f32[4,64], index: 12, kind: input, shape index: {}]
  %s13 = inlined_call_operand.vmem [shape: f32[4,1], index: 13, kind: input, shape index: {}]
  %s14 = inlined_call_operand.vmem [shape: f32[2,4,256], index: 14, kind: output, shape index: {}]
  %s15 = sld [smem:[#allocation0]]
  $region89: #{dual_stream_net_forward.1} parent=0
    _
  %s17 = ssub.s32 1, %s15
  %s18 = scalar_select 0, %s17, %s15
  loop: start=0, step=1, limit=4
  $region2: #{dual_stream_net_forward.1} parent=0 // loop_pre_header
    _
  $region3: #{dual_stream_net_forward.1} parent=0 // loop_header
    %s20 = sphi 0, %s24
    %p21 = scmp.ge.s32.totalorder %s20, 4
    %s30 = sphi 0, %s32
    %s33 = sphi 0, %s30
    %s34 = sphi 0, %s33
    %s50 = sphi 0, %s34
    %s56 = sphi 0, %s58
    %s59 = sphi 0, %s56
    %s60 = sphi 0, %s59
    %s76 = sphi 0, %s60
    %s80 = sphi 0, %s80
    %s82 = sphi 0, %s80
    %s83 = sphi 0, %s82
    %s97 = sphi 0, %s83
    %s101 = sphi 0, %s101
    %s103 = sphi 0, %s101
    %s104 = sphi 0, %s103
    %s118 = sphi 0, %s104
    %s122 = sphi 0, %s122
    %s124 = sphi 0, %s122
    %s125 = sphi 0, %s124
    %s139 = sphi 0, %s125
    %s143 = sphi 0, %s143
    %s145 = sphi 0, %s143
    %s146 = sphi 0, %s145
    %s160 = sphi 0, %s146
    %s164 = sphi 0, %s164
    %s166 = sphi 0, %s164
    %s167 = sphi 0, %s166
    %s181 = sphi 0, %s167
    %s185 = sphi 0, %s185
    %s187 = sphi 0, %s185
    %s188 = sphi 0, %s187
    %s202 = sphi 0, %s188
    %s206 = sphi 0, %s206
    %s208 = sphi 0, %s206
    %s209 = sphi 0, %s208
    %s223 = sphi 0, %s209
    %s227 = sphi 0, %s227
    %s229 = sphi 0, %s227
    %s230 = sphi 0, %s229
    %s244 = sphi 0, %s230
    %s248 = sphi 0, %s248
    %s250 = sphi 0, %s248
    %s251 = sphi 0, %s250
    %s265 = sphi 0, %s251
    %s269 = sphi 0, %s269
    %s271 = sphi 0, %s269
    %s272 = sphi 0, %s271
    %s286 = sphi 0, %s272
    %s290 = sphi 0, %s290
    %s292 = sphi 0, %s290
    %s293 = sphi 0, %s292
    %s307 = sphi 0, %s293
    %s311 = sphi 0, %s311
    %s313 = sphi 0, %s311
    %s314 = sphi 0, %s313
    %s328 = sphi 0, %s314
    %s334 = sphi 0, %s336
    %s337 = sphi 0, %s334
    %s338 = sphi 0, %s337
    %s354 = sphi 0, %s338
  $region4: #{dual_stream_net_forward.1} parent=0 // loop_header_branch
    %23 = sbr.rel (%p21) target = $region8
  $region5: #{dual_stream_net_forward.1} parent=0 // loop_body
    %s25 = ssub.s32 %s20, 1
    %s26 = ssub.s32 %s20, 2
    %s27 = sadd.s32 %s20, 1
    %s28 = ssub.s32 %s20, %s27
    %p29 = scmp.eq.s32.totalorder %s28, 0
    %s31 = sadd.s32 %s30, 1
    %s32 = scalar_select %p29, %s30, %s31
    %p35 = pneg %p29
    %p36 = scmp.eq.s32.totalorder %s20, 1
    %p37 = por %p35, %p36
    %p38 = scmp.ne.s32.totalorder %s30, %s33
    %p39 = scmp.eq.s32.totalorder %s20, 0
    %p40 = por %p38, %p39
    %p41 = scmp.ne.s32.totalorder %s30, %s33
    %p42 = scmp.eq.s32.totalorder %s25, 1
    %p43 = por %p41, %p42
    %p44 = scmp.ne.s32.totalorder %s33, %s34
    %p45 = scmp.eq.s32.totalorder %s25, 0
    %p46 = por %p44, %p45
    %p47 = scmp.ne.s32.totalorder %s33, %s34
    %p48 = scmp.eq.s32.totalorder %s26, 1
    %p49 = por %p47, %p48
    %p51 = scmp.ne.s32.totalorder %s34, %s50
    %p52 = scmp.eq.s32.totalorder %s26, 0
    %p53 = por %p51, %p52
    %s54 = ssub.s32 %s20, %s27
    %p55 = scmp.eq.s32.totalorder %s54, 0
    %s57 = sadd.s32 %s56, 1
    %s58 = scalar_select %p55, %s56, %s57
    %p61 = pneg %p55
    %p62 = scmp.eq.s32.totalorder %s20, 1
    %p63 = por %p61, %p62
    %p64 = scmp.ne.s32.totalorder %s56, %s59
    %p65 = scmp.eq.s32.totalorder %s20, 0
    %p66 = por %p64, %p65
    %p67 = scmp.ne.s32.totalorder %s56, %s59
    %p68 = scmp.eq.s32.totalorder %s25, 1
    %p69 = por %p67, %p68
    %p70 = scmp.ne.s32.totalorder %s59, %s60
    %p71 = scmp.eq.s32.totalorder %s25, 0
    %p72 = por %p70, %p71
    %p73 = scmp.ne.s32.totalorder %s59, %s60
    %p74 = scmp.eq.s32.totalorder %s26, 1
    %p75 = por %p73, %p74
    %p77 = scmp.ne.s32.totalorder %s60, %s76
    %p78 = scmp.eq.s32.totalorder %s26, 0
    %p79 = por %p77, %p78
    %s81 = sadd.s32 %s80, 1
    %p84 = scmp.eq.s32.totalorder %s20, 1
    %p85 = scmp.ne.s32.totalorder %s80, %s82
    %p86 = scmp.eq.s32.totalorder %s20, 0
    %p87 = por %p85, %p86
    %p88 = scmp.ne.s32.totalorder %s80, %s82
    %p89 = scmp.eq.s32.totalorder %s25, 1
    %p90 = por %p88, %p89
    %p91 = scmp.ne.s32.totalorder %s82, %s83
    %p92 = scmp.eq.s32.totalorder %s25, 0
    %p93 = por %p91, %p92
    %p94 = scmp.ne.s32.totalorder %s82, %s83
    %p95 = scmp.eq.s32.totalorder %s26, 1
    %p96 = por %p94, %p95
    %p98 = scmp.ne.s32.totalorder %s83, %s97
    %p99 = scmp.eq.s32.totalorder %s26, 0
    %p100 = por %p98, %p99
    %s102 = sadd.s32 %s101, 1
    %p105 = scmp.eq.s32.totalorder %s20, 1
    %p106 = scmp.ne.s32.totalorder %s101, %s103
    %p107 = scmp.eq.s32.totalorder %s20, 0
    %p108 = por %p106, %p107
    %p109 = scmp.ne.s32.totalorder %s101, %s103
    %p110 = scmp.eq.s32.totalorder %s25, 1
    %p111 = por %p109, %p110
    %p112 = scmp.ne.s32.totalorder %s103, %s104
    %p113 = scmp.eq.s32.totalorder %s25, 0
    %p114 = por %p112, %p113
    %p115 = scmp.ne.s32.totalorder %s103, %s104
    %p116 = scmp.eq.s32.totalorder %s26, 1
    %p117 = por %p115, %p116
    %p119 = scmp.ne.s32.totalorder %s104, %s118
    %p120 = scmp.eq.s32.totalorder %s26, 0
    %p121 = por %p119, %p120
    %s123 = sadd.s32 %s122, 1
    %p126 = scmp.eq.s32.totalorder %s20, 1
    %p127 = scmp.ne.s32.totalorder %s122, %s124
    %p128 = scmp.eq.s32.totalorder %s20, 0
    %p129 = por %p127, %p128
    %p130 = scmp.ne.s32.totalorder %s122, %s124
    %p131 = scmp.eq.s32.totalorder %s25, 1
    %p132 = por %p130, %p131
    %p133 = scmp.ne.s32.totalorder %s124, %s125
    %p134 = scmp.eq.s32.totalorder %s25, 0
    %p135 = por %p133, %p134
    %p136 = scmp.ne.s32.totalorder %s124, %s125
    %p137 = scmp.eq.s32.totalorder %s26, 1
    %p138 = por %p136, %p137
    %p140 = scmp.ne.s32.totalorder %s125, %s139
    %p141 = scmp.eq.s32.totalorder %s26, 0
    %p142 = por %p140, %p141
    %s144 = sadd.s32 %s143, 1
    %p147 = scmp.eq.s32.totalorder %s20, 1
    %p148 = scmp.ne.s32.totalorder %s143, %s145
    %p149 = scmp.eq.s32.totalorder %s20, 0
    %p150 = por %p148, %p149
    %p151 = scmp.ne.s32.totalorder %s143, %s145
    %p152 = scmp.eq.s32.totalorder %s25, 1
    %p153 = por %p151, %p152
    %p154 = scmp.ne.s32.totalorder %s145, %s146
    %p155 = scmp.eq.s32.totalorder %s25, 0
    %p156 = por %p154, %p155
    %p157 = scmp.ne.s32.totalorder %s145, %s146
    %p158 = scmp.eq.s32.totalorder %s26, 1
    %p159 = por %p157, %p158
    %p161 = scmp.ne.s32.totalorder %s146, %s160
    %p162 = scmp.eq.s32.totalorder %s26, 0
    %p163 = por %p161, %p162
    %s165 = sadd.s32 %s164, 1
    %p168 = scmp.eq.s32.totalorder %s20, 1
    %p169 = scmp.ne.s32.totalorder %s164, %s166
    %p170 = scmp.eq.s32.totalorder %s20, 0
    %p171 = por %p169, %p170
    %p172 = scmp.ne.s32.totalorder %s164, %s166
    %p173 = scmp.eq.s32.totalorder %s25, 1
    %p174 = por %p172, %p173
    %p175 = scmp.ne.s32.totalorder %s166, %s167
    %p176 = scmp.eq.s32.totalorder %s25, 0
    %p177 = por %p175, %p176
    %p178 = scmp.ne.s32.totalorder %s166, %s167
    %p179 = scmp.eq.s32.totalorder %s26, 1
    %p180 = por %p178, %p179
    %p182 = scmp.ne.s32.totalorder %s167, %s181
    %p183 = scmp.eq.s32.totalorder %s26, 0
    %p184 = por %p182, %p183
    %s186 = sadd.s32 %s185, 1
    %p189 = scmp.eq.s32.totalorder %s20, 1
    %p190 = scmp.ne.s32.totalorder %s185, %s187
    %p191 = scmp.eq.s32.totalorder %s20, 0
    %p192 = por %p190, %p191
    %p193 = scmp.ne.s32.totalorder %s185, %s187
    %p194 = scmp.eq.s32.totalorder %s25, 1
    %p195 = por %p193, %p194
    %p196 = scmp.ne.s32.totalorder %s187, %s188
    %p197 = scmp.eq.s32.totalorder %s25, 0
    %p198 = por %p196, %p197
    %p199 = scmp.ne.s32.totalorder %s187, %s188
    %p200 = scmp.eq.s32.totalorder %s26, 1
    %p201 = por %p199, %p200
    %p203 = scmp.ne.s32.totalorder %s188, %s202
    %p204 = scmp.eq.s32.totalorder %s26, 0
    %p205 = por %p203, %p204
    %s207 = sadd.s32 %s206, 1
    %p210 = scmp.eq.s32.totalorder %s20, 1
    %p211 = scmp.ne.s32.totalorder %s206, %s208
    %p212 = scmp.eq.s32.totalorder %s20, 0
    %p213 = por %p211, %p212
    %p214 = scmp.ne.s32.totalorder %s206, %s208
    %p215 = scmp.eq.s32.totalorder %s25, 1
    %p216 = por %p214, %p215
    %p217 = scmp.ne.s32.totalorder %s208, %s209
    %p218 = scmp.eq.s32.totalorder %s25, 0
    %p219 = por %p217, %p218
    %p220 = scmp.ne.s32.totalorder %s208, %s209
    %p221 = scmp.eq.s32.totalorder %s26, 1
    %p222 = por %p220, %p221
    %p224 = scmp.ne.s32.totalorder %s209, %s223
    %p225 = scmp.eq.s32.totalorder %s26, 0
    %p226 = por %p224, %p225
    %s228 = sadd.s32 %s227, 1
    %p231 = scmp.eq.s32.totalorder %s20, 1
    %p232 = scmp.ne.s32.totalorder %s227, %s229
    %p233 = scmp.eq.s32.totalorder %s20, 0
    %p234 = por %p232, %p233
    %p235 = scmp.ne.s32.totalorder %s227, %s229
    %p236 = scmp.eq.s32.totalorder %s25, 1
    %p237 = por %p235, %p236
    %p238 = scmp.ne.s32.totalorder %s229, %s230
    %p239 = scmp.eq.s32.totalorder %s25, 0
    %p240 = por %p238, %p239
    %p241 = scmp.ne.s32.totalorder %s229, %s230
    %p242 = scmp.eq.s32.totalorder %s26, 1
    %p243 = por %p241, %p242
    %p245 = scmp.ne.s32.totalorder %s230, %s244
    %p246 = scmp.eq.s32.totalorder %s26, 0
    %p247 = por %p245, %p246
    %s249 = sadd.s32 %s248, 1
    %p252 = scmp.eq.s32.totalorder %s20, 1
    %p253 = scmp.ne.s32.totalorder %s248, %s250
    %p254 = scmp.eq.s32.totalorder %s20, 0
    %p255 = por %p253, %p254
    %p256 = scmp.ne.s32.totalorder %s248, %s250
    %p257 = scmp.eq.s32.totalorder %s25, 1
    %p258 = por %p256, %p257
    %p259 = scmp.ne.s32.totalorder %s250, %s251
    %p260 = scmp.eq.s32.totalorder %s25, 0
    %p261 = por %p259, %p260
    %p262 = scmp.ne.s32.totalorder %s250, %s251
    %p263 = scmp.eq.s32.totalorder %s26, 1
    %p264 = por %p262, %p263
    %p266 = scmp.ne.s32.totalorder %s251, %s265
    %p267 = scmp.eq.s32.totalorder %s26, 0
    %p268 = por %p266, %p267
    %s270 = sadd.s32 %s269, 1
    %p273 = scmp.eq.s32.totalorder %s20, 1
    %p274 = scmp.ne.s32.totalorder %s269, %s271
    %p275 = scmp.eq.s32.totalorder %s20, 0
    %p276 = por %p274, %p275
    %p277 = scmp.ne.s32.totalorder %s269, %s271
    %p278 = scmp.eq.s32.totalorder %s25, 1
    %p279 = por %p277, %p278
    %p280 = scmp.ne.s32.totalorder %s271, %s272
    %p281 = scmp.eq.s32.totalorder %s25, 0
    %p282 = por %p280, %p281
    %p283 = scmp.ne.s32.totalorder %s271, %s272
    %p284 = scmp.eq.s32.totalorder %s26, 1
    %p285 = por %p283, %p284
    %p287 = scmp.ne.s32.totalorder %s272, %s286
    %p288 = scmp.eq.s32.totalorder %s26, 0
    %p289 = por %p287, %p288
    %s291 = sadd.s32 %s290, 1
    %p294 = scmp.eq.s32.totalorder %s20, 1
    %p295 = scmp.ne.s32.totalorder %s290, %s292
    %p296 = scmp.eq.s32.totalorder %s20, 0
    %p297 = por %p295, %p296
    %p298 = scmp.ne.s32.totalorder %s290, %s292
    %p299 = scmp.eq.s32.totalorder %s25, 1
    %p300 = por %p298, %p299
    %p301 = scmp.ne.s32.totalorder %s292, %s293
    %p302 = scmp.eq.s32.totalorder %s25, 0
    %p303 = por %p301, %p302
    %p304 = scmp.ne.s32.totalorder %s292, %s293
    %p305 = scmp.eq.s32.totalorder %s26, 1
    %p306 = por %p304, %p305
    %p308 = scmp.ne.s32.totalorder %s293, %s307
    %p309 = scmp.eq.s32.totalorder %s26, 0
    %p310 = por %p308, %p309
    %s312 = sadd.s32 %s311, 1
    %p315 = scmp.eq.s32.totalorder %s20, 1
    %p316 = scmp.ne.s32.totalorder %s311, %s313
    %p317 = scmp.eq.s32.totalorder %s20, 0
    %p318 = por %p316, %p317
    %p319 = scmp.ne.s32.totalorder %s311, %s313
    %p320 = scmp.eq.s32.totalorder %s25, 1
    %p321 = por %p319, %p320
    %p322 = scmp.ne.s32.totalorder %s313, %s314
    %p323 = scmp.eq.s32.totalorder %s25, 0
    %p324 = por %p322, %p323
    %p325 = scmp.ne.s32.totalorder %s313, %s314
    %p326 = scmp.eq.s32.totalorder %s26, 1
    %p327 = por %p325, %p326
    %p329 = scmp.ne.s32.totalorder %s314, %s328
    %p330 = scmp.eq.s32.totalorder %s26, 0
    %p331 = por %p329, %p330
    %s332 = ssub.s32 %s20, %s27
    %p333 = scmp.eq.s32.totalorder %s332, 0
    %s335 = sadd.s32 %s334, 1
    %s336 = scalar_select %p333, %s334, %s335
    %p339 = pneg %p333
    %p340 = scmp.eq.s32.totalorder %s20, 1
    %p341 = por %p339, %p340
    %p342 = scmp.ne.s32.totalorder %s334, %s337
    %p343 = scmp.eq.s32.totalorder %s20, 0
    %p344 = por %p342, %p343
    %p345 = scmp.ne.s32.totalorder %s334, %s337
    %p346 = scmp.eq.s32.totalorder %s25, 1
    %p347 = por %p345, %p346
    %p348 = scmp.ne.s32.totalorder %s337, %s338
    %p349 = scmp.eq.s32.totalorder %s25, 0
    %p350 = por %p348, %p349
    %p351 = scmp.ne.s32.totalorder %s337, %s338
    %p352 = scmp.eq.s32.totalorder %s26, 1
    %p353 = por %p351, %p352
    %p355 = scmp.ne.s32.totalorder %s338, %s354
    %p356 = scmp.eq.s32.totalorder %s26, 0
    %p357 = por %p355, %p356
    %p358 = scmp.le.s32.totalorder 1, %s20
    %p359 = scmp.lt.s32.totalorder %s20, 3
    %p360 = pnand %p358, %p359
    %p361 = pneg %p360
    // Predicated region
    $region9: #{dual_stream_net_forward.1} parent=5 // pred_check
      _
    $region10: #{dual_stream_net_forward.1} parent=5 // pred_check_branch
      %363 = sbr.rel (%p360) target = $region12
    $region11: #{dual_stream_net_forward.1} parent=5 // pred_region
      %s364 = ssub.s32 %s20, 1
      // Predicated region
      $region13: #{dual_stream_net_forward.1} parent=11 // pred_check
        %p365 = pneg %p93
      $region14: #{dual_stream_net_forward.1} parent=11 // pred_check_branch
        %367 = sbr.rel (%p365) target = $region16
      $region15: #{dual_stream_net_forward.1} parent=11 // pred_region
        _
      $region16: #{dual_stream_net_forward.1} parent=11 // pred_fallthru
        _
      // Predicated region
      $region17: #{dual_stream_net_forward.1} parent=11 // pred_check
        %p368 = pneg %p114
      $region18: #{dual_stream_net_forward.1} parent=11 // pred_check_branch
        %370 = sbr.rel (%p368) target = $region20
      $region19: #{dual_stream_net_forward.1} parent=11 // pred_region
        _
      $region20: #{dual_stream_net_forward.1} parent=11 // pred_fallthru
        _
      // Predicated region
      $region21: #{dual_stream_net_forward.1} parent=11 // pred_check
        %p371 = pneg %p135
      $region22: #{dual_stream_net_forward.1} parent=11 // pred_check_branch
        %373 = sbr.rel (%p371) target = $region24
      $region23: #{dual_stream_net_forward.1} parent=11 // pred_region
        _
      $region24: #{dual_stream_net_forward.1} parent=11 // pred_fallthru
        _
      // Predicated region
      $region25: #{dual_stream_net_forward.1} parent=11 // pred_check
        %p374 = pneg %p156
      $region26: #{dual_stream_net_forward.1} parent=11 // pred_check_branch
        %376 = sbr.rel (%p374) target = $region28
      $region27: #{dual_stream_net_forward.1} parent=11 // pred_region
        _
      $region28: #{dual_stream_net_forward.1} parent=11 // pred_fallthru
        _
      // Predicated region
      $region29: #{dual_stream_net_forward.1} parent=11 // pred_check
        %p377 = pneg %p177
      $region30: #{dual_stream_net_forward.1} parent=11 // pred_check_branch
        %379 = sbr.rel (%p377) target = $region32
      $region31: #{dual_stream_net_forward.1} parent=11 // pred_region
        _
      $region32: #{dual_stream_net_forward.1} parent=11 // pred_fallthru
        _
      // Predicated region
      $region33: #{dual_stream_net_forward.1} parent=11 // pred_check
        %p380 = pneg %p198
      $region34: #{dual_stream_net_forward.1} parent=11 // pred_check_branch
        %382 = sbr.rel (%p380) target = $region36
      $region35: #{dual_stream_net_forward.1} parent=11 // pred_region
        _
      $region36: #{dual_stream_net_forward.1} parent=11 // pred_fallthru
        _
      // Predicated region
      $region37: #{dual_stream_net_forward.1} parent=11 // pred_check
        %p383 = pneg %p219
      $region38: #{dual_stream_net_forward.1} parent=11 // pred_check_branch
        %385 = sbr.rel (%p383) target = $region40
      $region39: #{dual_stream_net_forward.1} parent=11 // pred_region
        _
      $region40: #{dual_stream_net_forward.1} parent=11 // pred_fallthru
        _
      // Predicated region
      $region41: #{dual_stream_net_forward.1} parent=11 // pred_check
        %p386 = pneg %p240
      $region42: #{dual_stream_net_forward.1} parent=11 // pred_check_branch
        %388 = sbr.rel (%p386) target = $region44
      $region43: #{dual_stream_net_forward.1} parent=11 // pred_region
        _
      $region44: #{dual_stream_net_forward.1} parent=11 // pred_fallthru
        _
      // Predicated region
      $region45: #{dual_stream_net_forward.1} parent=11 // pred_check
        %p389 = pneg %p261
      $region46: #{dual_stream_net_forward.1} parent=11 // pred_check_branch
        %391 = sbr.rel (%p389) target = $region48
      $region47: #{dual_stream_net_forward.1} parent=11 // pred_region
        _
      $region48: #{dual_stream_net_forward.1} parent=11 // pred_fallthru
        _
      // Predicated region
      $region49: #{dual_stream_net_forward.1} parent=11 // pred_check
        %p392 = pneg %p282
      $region50: #{dual_stream_net_forward.1} parent=11 // pred_check_branch
        %394 = sbr.rel (%p392) target = $region52
      $region51: #{dual_stream_net_forward.1} parent=11 // pred_region
        _
      $region52: #{dual_stream_net_forward.1} parent=11 // pred_fallthru
        _
      // Predicated region
      $region53: #{dual_stream_net_forward.1} parent=11 // pred_check
        %p395 = pneg %p303
      $region54: #{dual_stream_net_forward.1} parent=11 // pred_check_branch
        %397 = sbr.rel (%p395) target = $region56
      $region55: #{dual_stream_net_forward.1} parent=11 // pred_region
        _
      $region56: #{dual_stream_net_forward.1} parent=11 // pred_fallthru
        _
      // Predicated region
      $region57: #{dual_stream_net_forward.1} parent=11 // pred_check
        %p398 = pneg %p324
      $region58: #{dual_stream_net_forward.1} parent=11 // pred_check_branch
        %400 = sbr.rel (%p398) target = $region60
      $region59: #{dual_stream_net_forward.1} parent=11 // pred_region
        _
      $region60: #{dual_stream_net_forward.1} parent=11 // pred_fallthru
        _
    $region12: #{dual_stream_net_forward.1} parent=5 // pred_fallthru
      _
    %p401 = scmp.lt.s32.totalorder %s20, 2
    // Predicated region
    $region61: #{dual_stream_net_forward.1} parent=5 // pred_check
      %p402 = pneg %p401
    $region62: #{dual_stream_net_forward.1} parent=5 // pred_check_branch
      %404 = sbr.rel (%p402) target = $region64
    $region63: #{dual_stream_net_forward.1} parent=5 // pred_region
      // Predicated region
      $region65: #{dual_stream_net_forward.1} parent=63 // pred_check
        %p405 = pneg %p40
      $region66: #{dual_stream_net_forward.1} parent=63 // pred_check_branch
        %407 = sbr.rel (%p405) target = $region68
      $region67: #{dual_stream_net_forward.1} parent=63 // pred_region
        %p408 = scmp.lt.s32.totalorder %s20, 1
        %s409 = scalar_select %p408, %s20, 1
        %s410 = smul.addr %s409, 3
        %s411 = smul.addr %s410, 8
        %s412 = scalar_lea.vmem %s0, %s411
      $region68: #{dual_stream_net_forward.1} parent=63 // pred_fallthru
        _
      // Predicated region
      $region69: #{dual_stream_net_forward.1} parent=63 // pred_check
        %p413 = pneg %p66
      $region70: #{dual_stream_net_forward.1} parent=63 // pred_check_branch
        %415 = sbr.rel (%p413) target = $region72
      $region71: #{dual_stream_net_forward.1} parent=63 // pred_region
        %p416 = scmp.lt.s32.totalorder %s20, 1
        %s417 = scalar_select %p416, %s20, 1
        %s418 = smul.addr %s417, 14
        %s419 = smul.addr %s418, 8
        %s420 = scalar_lea.vmem %s1, %s419
      $region72: #{dual_stream_net_forward.1} parent=63 // pred_fallthru
        _
    $region64: #{dual_stream_net_forward.1} parent=5 // pred_fallthru
      _
    %p421 = scmp.le.s32.totalorder 1, %s20
    %p422 = scmp.lt.s32.totalorder %s20, 3
    %p423 = pnand %p421, %p422
    %p424 = pneg %p423
    // Predicated region
    $region73: #{dual_stream_net_forward.1} parent=5 // pred_check
      _
    $region74: #{dual_stream_net_forward.1} parent=5 // pred_check_branch
      %426 = sbr.rel (%p423) target = $region76
    $region75: #{dual_stream_net_forward.1} parent=5 // pred_region
      %s427 = ssub.s32 %s20, 1
      %p428 = scmp.lt.s32.totalorder %s25, 1
      %s429 = scalar_select %p428, %s25, 1
      %s430 = smul.addr %s429, 3
      %s431 = smul.addr %s430, 8
      %s432 = scalar_lea.vmem %s0, %s431
      %p433 = pneg %p46
      %p434 = pneg %p43
      %p435 = scmp.lt.s32.totalorder %s25, 1
      %s436 = scalar_select %p435, %s25, 1
      %s437 = smul.addr %s436, 14
      %s438 = smul.addr %s437, 8
      %s439 = scalar_lea.vmem %s1, %s438
      %p440 = pneg %p72
      %p441 = pneg %p69
      %p442 = pneg %p93
      %p443 = pneg %p90
      %p444 = pneg %p114
      %p445 = pneg %p111
      %p446 = pneg %p135
      %p447 = pneg %p132
      %p448 = pneg %p156
      %p449 = pneg %p153
      %p450 = pneg %p177
      %p451 = pneg %p174
      %p452 = pneg %p198
      %p453 = pneg %p195
      %p454 = pneg %p219
      %p455 = pneg %p216
      %p456 = pneg %p240
      %p457 = pneg %p237
      %p458 = pneg %p261
      %p459 = pneg %p258
      %p460 = pneg %p282
      %p461 = pneg %p279
      %p462 = pneg %p303
      %p463 = pneg %p300
      %p464 = pneg %p324
      %p465 = pneg %p321
      %p466 = pneg %p350
      %p467 = pneg %p347
      %p468 = scmp.lt.s32.totalorder %s25, 1
      %s469 = scalar_select %p468, %s25, 1
      %s470 = smul.addr %s469, 2
      %s471 = smul.addr %s470, 4
      %s472 = scalar_lea.vmem %s14, %s471
      %p473 = scmp.lt.s32.totalorder %s25, 1
      %s474 = scalar_select %p473, %s25, 1
      %s475 = smul.addr %s474, 3
      %s476 = smul.addr %s475, 8
      %s477 = scalar_lea.vmem %s0, %s476
      %p478 = scmp.lt.s32.totalorder %s25, 1
      %s479 = scalar_select %p478, %s25, 1
      %s480 = smul.addr %s479, 14
      %s481 = smul.addr %s480, 8
      %s482 = scalar_lea.vmem %s1, %s481
      %p483 = scmp.lt.s32.totalorder %s25, 1
      %s484 = scalar_select %p483, %s25, 1
      %s485 = smul.addr %s484, 2
      %s486 = smul.addr %s485, 4
      %s487 = scalar_lea.vmem %s14, %s486
      %v488 = vld [vmem:[%s477] sm:$0xff]
      %v489 = vld [vmem:[%s477 + $0x8] sm:$0xff]
      %v490 = vld [vmem:[%s477 + $0x10] sm:$0xff]
      %v491 = vld [vmem:[%s482] sm:$0xff]
      %v492 = vld [vmem:[%s482 + $0x8] sm:$0xff]
      %v493 = vld [vmem:[%s482 + $0x10] sm:$0xff]
      %v494 = vld [vmem:[%s482 + $0x18] sm:$0xff]
      %v495 = vld [vmem:[%s482 + $0x20] sm:$0xff]
      %v496 = vld [vmem:[%s482 + $0x28] sm:$0xff]
      %v497 = vld [vmem:[%s482 + $0x30] sm:$0xff]
      %v498 = vld [vmem:[%s482 + $0x38] sm:$0xff]
      %v499 = vld [vmem:[%s482 + $0x40] sm:$0xff]
      %v500 = vld [vmem:[%s482 + $0x48] sm:$0xff]
      %v501 = vld [vmem:[%s482 + $0x50] sm:$0xff]
      %v502 = vld [vmem:[%s482 + $0x58] sm:$0xff]
      %v503 = vld [vmem:[%s482 + $0x60] sm:$0xff]
      %v504 = vld [vmem:[%s482 + $0x68] sm:$0xff]
      %vm505 = vcmask 523264
      %v506 = vsel %vm505, %v488, 0.0
      %507 = vadd.xlane.f32.xlu0 %v506
      %v508 = vpop.xlane.xlu0 %507
      %v509 = vsel %vm505, %v489, 0.0
      %510 = vadd.xlane.f32.xlu0 %v509
      %v511 = vpop.xlane.xlu0 %510
      %v512 = vsel %vm505, %v490, 0.0
      %513 = vadd.xlane.f32.xlu0 %v512
      %v514 = vpop.xlane.xlu0 %513
      %v515 = vsel %vm505, %v491, 0.0
      %516 = vadd.xlane.f32.xlu0 %v515
      %v517 = vpop.xlane.xlu0 %516
      %v518 = vsel %vm505, %v492, 0.0
      %519 = vadd.xlane.f32.xlu0 %v518
      %v520 = vpop.xlane.xlu0 %519
      %v521 = vsel %vm505, %v493, 0.0
      %522 = vadd.xlane.f32.xlu0 %v521
      %v523 = vpop.xlane.xlu0 %522
      %v524 = vsel %vm505, %v494, 0.0
      %525 = vadd.xlane.f32.xlu0 %v524
      %v526 = vpop.xlane.xlu0 %525
      %v527 = vsel %vm505, %v495, 0.0
      %528 = vadd.xlane.f32.xlu0 %v527
      %v529 = vpop.xlane.xlu0 %528
      %v530 = vsel %vm505, %v496, 0.0
      %531 = vadd.xlane.f32.xlu0 %v530
      %v532 = vpop.xlane.xlu0 %531
      %v533 = vsel %vm505, %v497, 0.0
      %534 = vadd.xlane.f32.xlu0 %v533
      %v535 = vpop.xlane.xlu0 %534
      %v536 = vsel %vm505, %v498, 0.0
      %537 = vadd.xlane.f32.xlu0 %v536
      %v538 = vpop.xlane.xlu0 %537
      %v539 = vsel %vm505, %v499, 0.0
      %540 = vadd.xlane.f32.xlu0 %v539
      %v541 = vpop.xlane.xlu0 %540
      %v542 = vsel %vm505, %v500, 0.0
      %543 = vadd.xlane.f32.xlu0 %v542
      %v544 = vpop.xlane.xlu0 %543
      %v545 = vsel %vm505, %v501, 0.0
      %546 = vadd.xlane.f32.xlu0 %v545
      %v547 = vpop.xlane.xlu0 %546
      %v548 = vsel %vm505, %v502, 0.0
      %549 = vadd.xlane.f32.xlu0 %v548
      %v550 = vpop.xlane.xlu0 %549
      %v551 = vsel %vm505, %v503, 0.0
      %552 = vadd.xlane.f32.xlu0 %v551
      %v553 = vpop.xlane.xlu0 %552
      %v554 = vsel %vm505, %v504, 0.0
      %555 = vadd.xlane.f32.xlu0 %v554
      %v556 = vpop.xlane.xlu0 %555
      %v557 = vrcp.pop 64.0
      %v558 = vmul.f32 %v508, %v557
      %v559 = vmul.f32 %v511, %v557
      %v560 = vmul.f32 %v514, %v557
      %v561 = vmul.f32 %v517, %v557
      %v562 = vmul.f32 %v520, %v557
      %v563 = vmul.f32 %v523, %v557
      %v564 = vmul.f32 %v526, %v557
      %v565 = vmul.f32 %v529, %v557
      %v566 = vmul.f32 %v532, %v557
      %v567 = vmul.f32 %v535, %v557
      %v568 = vmul.f32 %v538, %v557
      %v569 = vmul.f32 %v541, %v557
      %v570 = vmul.f32 %v544, %v557
      %v571 = vmul.f32 %v547, %v557
      %v572 = vmul.f32 %v550, %v557
      %v573 = vmul.f32 %v553, %v557
      %v574 = vmul.f32 %v556, %v557
      %v575 = vld [vmem:[%s2] sm:$0xff]
      %v576 = vld [vmem:[%s2 + $0x8] sm:$0xff]
      %v577 = vld [vmem:[%s2 + $0x10] sm:$0xff]
      %v578 = vld [vmem:[%s2 + $0x18] sm:$0xff]
      %v579 = vld [vmem:[%s2 + $0x20] sm:$0xff]
      %v580 = vld [vmem:[%s2 + $0x28] sm:$0xff]
      %v581 = vld [vmem:[%s2 + $0x30] sm:$0xff]
      %v582 = vld [vmem:[%s2 + $0x38] sm:$0xff]
      %v583 = vld [vmem:[%s2 + $0x40] sm:$0xff]
      %v584 = vld [vmem:[%s2 + $0x48] sm:$0xff]
      %v585 = vld [vmem:[%s2 + $0x50] sm:$0xff]
      %v586 = vld [vmem:[%s2 + $0x58] sm:$0xff]
      %v587 = vld [vmem:[%s2 + $0x60] sm:$0xff]
      %v588 = vld [vmem:[%s2 + $0x68] sm:$0xff]
      %v589 = vld [vmem:[%s2 + $0x70] sm:$0xff]
      %v590 = vld [vmem:[%s2 + $0x78] sm:$0xff]
      %v591 = vld [vmem:[%s2 + $0x80] sm:$0xff]
      %v592 = vmul.f32 %v575, %v558
      %v593 = vmul.f32 %v576, %v559
      %v594 = vmul.f32 %v577, %v560
      %v595 = vmul.f32 %v578, %v561
      %v596 = vmul.f32 %v579, %v562
      %v597 = vmul.f32 %v580, %v563
      %v598 = vmul.f32 %v581, %v564
      %v599 = vmul.f32 %v582, %v565
      %v600 = vmul.f32 %v583, %v566
      %v601 = vmul.f32 %v584, %v567
      %v602 = vmul.f32 %v585, %v568
      %v603 = vmul.f32 %v586, %v569
      %v604 = vmul.f32 %v587, %v570
      %v605 = vmul.f32 %v588, %v571
      %v606 = vmul.f32 %v589, %v572
      %v607 = vmul.f32 %v590, %v573
      %v608 = vmul.f32 %v591, %v574
      %vm609 = vcmask 64512
      %v610 = vsel %vm609, %v592, 0.0
      %v611 = vsel %vm609, %v593, 0.0
      %v612 = vadd.f32 %v610, %v611
      %v613 = vsel %vm609, %v594, 0.0
      %v614 = vadd.f32 %v612, %v613
      %v615 = vsel %vm609, %v595, 0.0
      %v616 = vadd.f32 %v614, %v615
      %v617 = vsel %vm609, %v596, 0.0
      %v618 = vadd.f32 %v616, %v617
      %v619 = vsel %vm609, %v597, 0.0
      %v620 = vadd.f32 %v618, %v619
      %v621 = vsel %vm609, %v598, 0.0
      %v622 = vadd.f32 %v620, %v621
      %v623 = vsel %vm609, %v599, 0.0
      %v624 = vadd.f32 %v622, %v623
      %v625 = vsel %vm609, %v600, 0.0
      %v626 = vadd.f32 %v624, %v625
      %v627 = vsel %vm609, %v601, 0.0
      %v628 = vadd.f32 %v626, %v627
      %v629 = vsel %vm609, %v602, 0.0
      %v630 = vadd.f32 %v628, %v629
      %v631 = vsel %vm609, %v603, 0.0
      %v632 = vadd.f32 %v630, %v631
      %v633 = vsel %vm609, %v604, 0.0
      %v634 = vadd.f32 %v632, %v633
      %v635 = vsel %vm609, %v605, 0.0
      %v636 = vadd.f32 %v634, %v635
      %v637 = vsel %vm609, %v606, 0.0
      %v638 = vadd.f32 %v636, %v637
      %v639 = vsel %vm609, %v607, 0.0
      %v640 = vadd.f32 %v638, %v639
      %v641 = vsel %vm609, %v608, 0.0
      %v642 = vadd.f32 %v640, %v641
      %v643 = vrot.slane %v642, 4
      %v644 = vadd.f32 %v642, %v643
      %v645 = vrot.slane %v644, 2
      %v646 = vadd.f32 %v644, %v645
      %v647 = vrot.slane %v646, 1
      %v648 = vadd.f32 %v646, %v647
      %v649 = vld [vmem:[%s3] sm:$0x1]
      %v650 = vadd.f32 %v648, %v649
      %v651 = vmax.f32 %v650, 0.0
      %v652 = vld [vmem:[%s4] sm:$0xff]
      %v653 = vld [vmem:[%s4 + $0x8] sm:$0xff]
      %v654 = vld [vmem:[%s4 + $0x10] sm:$0xff]
      %v655 = vld [vmem:[%s4 + $0x18] sm:$0xff]
      %v656 = vld [vmem:[%s4 + $0x20] sm:$0xff]
      %v657 = vld [vmem:[%s4 + $0x28] sm:$0xff]
      %v658 = vld [vmem:[%s4 + $0x30] sm:$0xff]
      %v659 = vld [vmem:[%s4 + $0x38] sm:$0xff]
      %v660 = vld [vmem:[%s4 + $0x40] sm:$0xff]
      %v661 = vld [vmem:[%s4 + $0x48] sm:$0xff]
      %v662 = vld [vmem:[%s4 + $0x50] sm:$0xff]
      %v663 = vld [vmem:[%s4 + $0x58] sm:$0xff]
      %v664 = vld [vmem:[%s4 + $0x60] sm:$0xff]
      %v665 = vld [vmem:[%s4 + $0x68] sm:$0xff]
      %v666 = vld [vmem:[%s4 + $0x70] sm:$0xff]
      %v667 = vld [vmem:[%s4 + $0x78] sm:$0xff]
      %v668 = vld [vmem:[%s4 + $0x80] sm:$0xff]
      %v669 = vlaneseq
      %v670 = vshrl.u32 %v669, 7
      %v671 = vsub.s32 0, %v670
      %v672 = vrot.slane %v651, %v671
      %v673 = vmul.f32 %v652, %v672
      %v674 = vmul.f32 %v653, %v672
      %v675 = vmul.f32 %v654, %v672
      %v676 = vmul.f32 %v655, %v672
      %v677 = vmul.f32 %v656, %v672
      %v678 = vmul.f32 %v657, %v672
      %v679 = vmul.f32 %v658, %v672
      %v680 = vmul.f32 %v659, %v672
      %v681 = vmul.f32 %v660, %v672
      %v682 = vmul.f32 %v661, %v672
      %v683 = vmul.f32 %v662, %v672
      %v684 = vmul.f32 %v663, %v672
      %v685 = vmul.f32 %v664, %v672
      %v686 = vmul.f32 %v665, %v672
      %v687 = vmul.f32 %v666, %v672
      %v688 = vmul.f32 %v667, %v672
      %v689 = vmul.f32 %v668, %v672
      %v690 = vsel %vm609, %v673, 0.0
      %691 = vadd.xlane.f32.xlu0 %v690
      %v692 = vpop.xlane.xlu0 %691
      %v693 = vsel %vm609, %v674, 0.0
      %694 = vadd.xlane.f32.xlu0 %v693
      %v695 = vpop.xlane.xlu0 %694
      %v696 = vsel %vm609, %v675, 0.0
      %697 = vadd.xlane.f32.xlu0 %v696
      %v698 = vpop.xlane.xlu0 %697
      %v699 = vsel %vm609, %v676, 0.0
      %700 = vadd.xlane.f32.xlu0 %v699
      %v701 = vpop.xlane.xlu0 %700
      %v702 = vsel %vm609, %v677, 0.0
      %703 = vadd.xlane.f32.xlu0 %v702
      %v704 = vpop.xlane.xlu0 %703
      %v705 = vsel %vm609, %v678, 0.0
      %706 = vadd.xlane.f32.xlu0 %v705
      %v707 = vpop.xlane.xlu0 %706
      %v708 = vsel %vm609, %v679, 0.0
      %709 = vadd.xlane.f32.xlu0 %v708
      %v710 = vpop.xlane.xlu0 %709
      %v711 = vsel %vm609, %v680, 0.0
      %712 = vadd.xlane.f32.xlu0 %v711
      %v713 = vpop.xlane.xlu0 %712
      %v714 = vsel %vm609, %v681, 0.0
      %715 = vadd.xlane.f32.xlu0 %v714
      %v716 = vpop.xlane.xlu0 %715
      %v717 = vsel %vm609, %v682, 0.0
      %718 = vadd.xlane.f32.xlu0 %v717
      %v719 = vpop.xlane.xlu0 %718
      %v720 = vsel %vm609, %v683, 0.0
      %721 = vadd.xlane.f32.xlu0 %v720
      %v722 = vpop.xlane.xlu0 %721
      %v723 = vsel %vm609, %v684, 0.0
      %724 = vadd.xlane.f32.xlu0 %v723
      %v725 = vpop.xlane.xlu0 %724
      %v726 = vsel %vm609, %v685, 0.0
      %727 = vadd.xlane.f32.xlu0 %v726
      %v728 = vpop.xlane.xlu0 %727
      %v729 = vsel %vm609, %v686, 0.0
      %730 = vadd.xlane.f32.xlu0 %v729
      %v731 = vpop.xlane.xlu0 %730
      %v732 = vsel %vm609, %v687, 0.0
      %733 = vadd.xlane.f32.xlu0 %v732
      %v734 = vpop.xlane.xlu0 %733
      %v735 = vsel %vm609, %v688, 0.0
      %736 = vadd.xlane.f32.xlu0 %v735
      %v737 = vpop.xlane.xlu0 %736
      %v738 = vsel %vm609, %v689, 0.0
      %739 = vadd.xlane.f32.xlu0 %v738
      %v740 = vpop.xlane.xlu0 %739
      %v741 = vld [vmem:[%s5] sm:$0xff]
      %v742 = vld [vmem:[%s5 + $0x8] sm:$0xff]
      %v743 = vld [vmem:[%s5 + $0x10] sm:$0xff]
      %v744 = vld [vmem:[%s5 + $0x18] sm:$0xff]
      %v745 = vld [vmem:[%s5 + $0x20] sm:$0xff]
      %v746 = vld [vmem:[%s5 + $0x28] sm:$0xff]
      %v747 = vld [vmem:[%s5 + $0x30] sm:$0xff]
      %v748 = vld [vmem:[%s5 + $0x38] sm:$0xff]
      %v749 = vld [vmem:[%s5 + $0x40] sm:$0xff]
      %v750 = vld [vmem:[%s5 + $0x48] sm:$0xff]
      %v751 = vld [vmem:[%s5 + $0x50] sm:$0xff]
      %v752 = vld [vmem:[%s5 + $0x58] sm:$0xff]
      %v753 = vld [vmem:[%s5 + $0x60] sm:$0xff]
      %v754 = vld [vmem:[%s5 + $0x68] sm:$0xff]
      %v755 = vld [vmem:[%s5 + $0x70] sm:$0xff]
      %v756 = vld [vmem:[%s5 + $0x78] sm:$0xff]
      %v757 = vld [vmem:[%s5 + $0x80] sm:$0xff]
      %v758 = vadd.f32 %v692, %v741
      %v759 = vadd.f32 %v695, %v742
      %v760 = vadd.f32 %v698, %v743
      %v761 = vadd.f32 %v701, %v744
      %v762 = vadd.f32 %v704, %v745
      %v763 = vadd.f32 %v707, %v746
      %v764 = vadd.f32 %v710, %v747
      %v765 = vadd.f32 %v713, %v748
      %v766 = vadd.f32 %v716, %v749
      %v767 = vadd.f32 %v719, %v750
      %v768 = vadd.f32 %v722, %v751
      %v769 = vadd.f32 %v725, %v752
      %v770 = vadd.f32 %v728, %v753
      %v771 = vadd.f32 %v731, %v754
      %v772 = vadd.f32 %v734, %v755
      %v773 = vadd.f32 %v737, %v756
      %v774 = vadd.f32 %v740, %v757
      %v775 = vsub.f32 0.0, %v758
      %v776 = vsub.f32 0.0, %v759
      %v777 = vsub.f32 0.0, %v760
      %v778 = vsub.f32 0.0, %v761
      %v779 = vsub.f32 0.0, %v762
      %v780 = vsub.f32 0.0, %v763
      %v781 = vsub.f32 0.0, %v764
      %v782 = vsub.f32 0.0, %v765
      %v783 = vsub.f32 0.0, %v766
      %v784 = vsub.f32 0.0, %v767
      %v785 = vsub.f32 0.0, %v768
      %v786 = vsub.f32 0.0, %v769
      %v787 = vsub.f32 0.0, %v770
      %v788 = vsub.f32 0.0, %v771
      %v789 = vsub.f32 0.0, %v772
      %v790 = vsub.f32 0.0, %v773
      %v791 = vsub.f32 0.0, %v774
      %v792 = vmul.f32 %v775, 1.442695
      %v793 = vpow.pop %v792
      %v794 = vmul.f32 %v776, 1.442695
      %v795 = vpow.pop %v794
      %v796 = vmul.f32 %v777, 1.442695
      %v797 = vpow.pop %v796
      %v798 = vmul.f32 %v778, 1.442695
      %v799 = vpow.pop %v798
      %v800 = vmul.f32 %v779, 1.442695
      %v801 = vpow.pop %v800
      %v802 = vmul.f32 %v780, 1.442695
      %v803 = vpow.pop %v802
      %v804 = vmul.f32 %v781, 1.442695
      %v805 = vpow.pop %v804
      %v806 = vmul.f32 %v782, 1.442695
      %v807 = vpow.pop %v806
      %v808 = vmul.f32 %v783, 1.442695
      %v809 = vpow.pop %v808
      %v810 = vmul.f32 %v784, 1.442695
      %v811 = vpow.pop %v810
      %v812 = vmul.f32 %v785, 1.442695
      %v813 = vpow.pop %v812
      %v814 = vmul.f32 %v786, 1.442695
      %v815 = vpow.pop %v814
      %v816 = vmul.f32 %v787, 1.442695
      %v817 = vpow.pop %v816
      %v818 = vmul.f32 %v788, 1.442695
      %v819 = vpow.pop %v818
      %v820 = vmul.f32 %v789, 1.442695
      %v821 = vpow.pop %v820
      %v822 = vmul.f32 %v790, 1.442695
      %v823 = vpow.pop %v822
      %v824 = vmul.f32 %v791, 1.442695
      %v825 = vpow.pop %v824
      %v826 = vadd.f32 %v793, 1.0
      %v827 = vadd.f32 %v795, 1.0
      %v828 = vadd.f32 %v797, 1.0
      %v829 = vadd.f32 %v799, 1.0
      %v830 = vadd.f32 %v801, 1.0
      %v831 = vadd.f32 %v803, 1.0
      %v832 = vadd.f32 %v805, 1.0
      %v833 = vadd.f32 %v807, 1.0
      %v834 = vadd.f32 %v809, 1.0
      %v835 = vadd.f32 %v811, 1.0
      %v836 = vadd.f32 %v813, 1.0
      %v837 = vadd.f32 %v815, 1.0
      %v838 = vadd.f32 %v817, 1.0
      %v839 = vadd.f32 %v819, 1.0
      %v840 = vadd.f32 %v821, 1.0
      %v841 = vadd.f32 %v823, 1.0
      %v842 = vadd.f32 %v825, 1.0
      %v843 = vrcp.pop %v826
      %v844 = vmul.f32 1.0, %v843
      %v845 = vrcp.pop %v827
      %v846 = vmul.f32 1.0, %v845
      %v847 = vrcp.pop %v828
      %v848 = vmul.f32 1.0, %v847
      %v849 = vrcp.pop %v829
      %v850 = vmul.f32 1.0, %v849
      %v851 = vrcp.pop %v830
      %v852 = vmul.f32 1.0, %v851
      %v853 = vrcp.pop %v831
      %v854 = vmul.f32 1.0, %v853
      %v855 = vrcp.pop %v832
      %v856 = vmul.f32 1.0, %v855
      %v857 = vrcp.pop %v833
      %v858 = vmul.f32 1.0, %v857
      %v859 = vrcp.pop %v834
      %v860 = vmul.f32 1.0, %v859
      %v861 = vrcp.pop %v835
      %v862 = vmul.f32 1.0, %v861
      %v863 = vrcp.pop %v836
      %v864 = vmul.f32 1.0, %v863
      %v865 = vrcp.pop %v837
      %v866 = vmul.f32 1.0, %v865
      %v867 = vrcp.pop %v838
      %v868 = vmul.f32 1.0, %v867
      %v869 = vrcp.pop %v839
      %v870 = vmul.f32 1.0, %v869
      %v871 = vrcp.pop %v840
      %v872 = vmul.f32 1.0, %v871
      %v873 = vrcp.pop %v841
      %v874 = vmul.f32 1.0, %v873
      %v875 = vrcp.pop %v842
      %v876 = vmul.f32 1.0, %v875
      %878 = vset.pattern.permute.xlu0 0
      %879 = vperm.xlu0 %878, %v844
      %v880 = vpop.permute.xlu0 %879
      %883 = vset.pattern.permute.xlu0 0
      %884 = vperm.xlu0 %883, %v846
      %v885 = vpop.permute.xlu0 %884
      %888 = vset.pattern.permute.xlu0 0
      %889 = vperm.xlu0 %888, %v848
      %v890 = vpop.permute.xlu0 %889
      %893 = vset.pattern.permute.xlu0 0
      %894 = vperm.xlu0 %893, %v850
      %v895 = vpop.permute.xlu0 %894
      %898 = vset.pattern.permute.xlu0 0
      %899 = vperm.xlu0 %898, %v852
      %v900 = vpop.permute.xlu0 %899
      %903 = vset.pattern.permute.xlu0 0
      %904 = vperm.xlu0 %903, %v854
      %v905 = vpop.permute.xlu0 %904
      %908 = vset.pattern.permute.xlu0 0
      %909 = vperm.xlu0 %908, %v856
      %v910 = vpop.permute.xlu0 %909
      %913 = vset.pattern.permute.xlu0 0
      %914 = vperm.xlu0 %913, %v858
      %v915 = vpop.permute.xlu0 %914
      %918 = vset.pattern.permute.xlu0 0
      %919 = vperm.xlu0 %918, %v860
      %v920 = vpop.permute.xlu0 %919
      %923 = vset.pattern.permute.xlu0 0
      %924 = vperm.xlu0 %923, %v862
      %v925 = vpop.permute.xlu0 %924
      %928 = vset.pattern.permute.xlu0 0
      %929 = vperm.xlu0 %928, %v864
      %v930 = vpop.permute.xlu0 %929
      %933 = vset.pattern.permute.xlu0 0
      %934 = vperm.xlu0 %933, %v866
      %v935 = vpop.permute.xlu0 %934
      %938 = vset.pattern.permute.xlu0 0
      %939 = vperm.xlu0 %938, %v868
      %v940 = vpop.permute.xlu0 %939
      %943 = vset.pattern.permute.xlu0 0
      %944 = vperm.xlu0 %943, %v870
      %v945 = vpop.permute.xlu0 %944
      %948 = vset.pattern.permute.xlu0 0
      %949 = vperm.xlu0 %948, %v872
      %v950 = vpop.permute.xlu0 %949
      %953 = vset.pattern.permute.xlu0 0
      %954 = vperm.xlu0 %953, %v874
      %v955 = vpop.permute.xlu0 %954
      %958 = vset.pattern.permute.xlu0 0
      %959 = vperm.xlu0 %958, %v876
      %v960 = vpop.permute.xlu0 %959
      %v962 = vmul.f32 %v488, %v880
      %v963 = vmul.f32 %v489, %v885
      %v964 = vmul.f32 %v490, %v890
      %v965 = vmul.f32 %v491, %v895
      %v966 = vmul.f32 %v492, %v900
      %v967 = vmul.f32 %v493, %v905
      %v968 = vmul.f32 %v494, %v910
      %v969 = vmul.f32 %v495, %v915
      %v970 = vmul.f32 %v496, %v920
      %v971 = vmul.f32 %v497, %v925
      %v972 = vmul.f32 %v498, %v930
      %v973 = vmul.f32 %v499, %v935
      %v974 = vmul.f32 %v500, %v940
      %v975 = vmul.f32 %v501, %v945
      %v976 = vmul.f32 %v502, %v950
      %v977 = vmul.f32 %v503, %v955
      %v978 = vmul.f32 %v504, %v960
      %v979 = vld [vmem:[%s6] sm:$0xff]
      %v980 = vld [vmem:[%s6 + $0x8] sm:$0xff]
      %v981 = vld [vmem:[%s6 + $0x10] sm:$0xff]
      %v982 = vld [vmem:[%s6 + $0x18] sm:$0xff]
      %v983 = vld [vmem:[%s6 + $0x20] sm:$0xff]
      %v984 = vld [vmem:[%s6 + $0x28] sm:$0xff]
      %v985 = vld [vmem:[%s6 + $0x30] sm:$0xff]
      %v986 = vld [vmem:[%s6 + $0x38] sm:$0xff]
      %v987 = vld [vmem:[%s6 + $0x40] sm:$0xff]
      %v988 = vld [vmem:[%s6 + $0x48] sm:$0xff]
      %v989 = vld [vmem:[%s6 + $0x50] sm:$0xff]
      %v990 = vld [vmem:[%s6 + $0x58] sm:$0xff]
      %v991 = vld [vmem:[%s6 + $0x60] sm:$0xff]
      %v992 = vld [vmem:[%s6 + $0x68] sm:$0xff]
      %v993 = vld [vmem:[%s6 + $0x70] sm:$0xff]
      %v994 = vld [vmem:[%s6 + $0x78] sm:$0xff]
      %v995 = vld [vmem:[%s7] sm:$0xff]
      %v996 = vld [vmem:[%s7 + $0x8] sm:$0xff]
      %v997 = vld [vmem:[%s7 + $0x10] sm:$0xff]
      %v998 = vld [vmem:[%s7 + $0x18] sm:$0xff]
      %v999 = vld [vmem:[%s7 + $0x20] sm:$0xff]
      %v1000 = vld [vmem:[%s7 + $0x28] sm:$0xff]
      %v1001 = vld [vmem:[%s7 + $0x30] sm:$0xff]
      %v1002 = vld [vmem:[%s7 + $0x38] sm:$0xff]
      %1004 = vset.pattern.permute.xlu0 0
      %1005 = vperm.xlu0 %1004, %v995
      %v1006 = vpop.permute.xlu0 %1005
      %1009 = vset.pattern.permute.xlu0 0
      %1010 = vperm.xlu0 %1009, %v996
      %v1011 = vpop.permute.xlu0 %1010
      %1014 = vset.pattern.permute.xlu0 0
      %1015 = vperm.xlu0 %1014, %v997
      %v1016 = vpop.permute.xlu0 %1015
      %1019 = vset.pattern.permute.xlu0 0
      %1020 = vperm.xlu0 %1019, %v998
      %v1021 = vpop.permute.xlu0 %1020
      %1024 = vset.pattern.permute.xlu0 0
      %1025 = vperm.xlu0 %1024, %v999
      %v1026 = vpop.permute.xlu0 %1025
      %1029 = vset.pattern.permute.xlu0 0
      %1030 = vperm.xlu0 %1029, %v1000
      %v1031 = vpop.permute.xlu0 %1030
      %1034 = vset.pattern.permute.xlu0 0
      %1035 = vperm.xlu0 %1034, %v1001
      %v1036 = vpop.permute.xlu0 %1035
      %1039 = vset.pattern.permute.xlu0 0
      %1040 = vperm.xlu0 %1039, %v1002
      %v1041 = vpop.permute.xlu0 %1040
      %v1044 = vsel %vm609, %v980, 0
      %v1047 = vsel %vm609, %v982, 0
      %v1050 = vsel %vm609, %v984, 0
      %v1053 = vsel %vm609, %v986, 0
      %v1056 = vsel %vm609, %v988, 0
      %v1059 = vsel %vm609, %v990, 0
      %v1062 = vsel %vm609, %v992, 0
      %v1065 = vsel %vm609, %v994, 0
      %1067 = vmatprep.subr.mxu0 0.0
      %1068 = vmatpush1.msra.mxu0 %v962
      %1069 = vmatprep.subr.mxu0 0.0
      %1070 = vmatpush1.msra.mxu0 %v963
      %1071 = vmatprep.subr.mxu0 0.0
      %1072 = vmatpush1.msra.mxu0 %v964
      %1073 = vmatprep.subr.mxu0 0.0
      %1074 = vmatpush1.msra.mxu0 %v965
      %1075 = vmatprep.subr.mxu0 0.0
      %1076 = vmatpush1.msra.mxu0 %v966
      %1077 = vmatprep.subr.mxu0 0.0
      %1078 = vmatpush1.msra.mxu0 %v967
      %1079 = vmatprep.subr.mxu0 0.0
      %1080 = vmatpush1.msra.mxu0 %v968
      %1081 = vmatprep.subr.mxu0 0.0
      %1082 = vmatpush1.msra.mxu0 %v969
      %1083 = vmatprep.subr.mxu0 0.0
      %1084 = vmatpush1.msra.mxu0 %v970
      %1085 = vmatprep.subr.mxu0 0.0
      %1086 = vmatpush1.msra.mxu0 %v971
      %1087 = vmatprep.subr.mxu0 0.0
      %1088 = vmatpush1.msra.mxu0 %v972
      %1089 = vmatprep.subr.mxu0 0.0
      %1090 = vmatpush1.msra.mxu0 %v973
      %1091 = vmatprep.subr.mxu0 0.0
      %1092 = vmatpush1.msra.mxu0 %v974
      %1093 = vmatprep.subr.mxu0 0.0
      %1094 = vmatpush1.msra.mxu0 %v975
      %1095 = vmatprep.subr.mxu0 0.0
      %1096 = vmatpush1.msra.mxu0 %v976
      %1097 = vmatprep.subr.mxu0 0.0
      %1098 = vmatpush1.msra.mxu0 %v977
      %1099 = vmatprep.subr.mxu0 0.0
      %1100 = vmatpush1.msra.mxu0 %v978
      %1101 = vmatprep.subr.mxu0 0.0
      %1102 = vmatpush1.msra.mxu0 0.0
      %1103 = vmatprep.subr.mxu0 0.0
      %1104 = vmatpush1.msra.mxu0 0.0
      %1105 = vmatprep.subr.mxu0 0.0
      %1106 = vmatpush1.msra.mxu0 0.0
      %1107 = vmatprep.subr.mxu0 0.0
      %1108 = vmatpush1.msra.mxu0 0.0
      %1109 = vmatprep.subr.mxu0 0.0
      %1110 = vmatpush1.msra.mxu0 0.0
      %1111 = vmatprep.subr.mxu0 0.0
      %1112 = vmatpush1.msra.mxu0 0.0
      %1113 = vmatprep.subr.mxu0 0.0
      %1114 = vmatpush1.msra.mxu0 0.0
      %1115 = vmatprep.subr.mxu0 0.0
      %1116 = vmatpush1.msra.mxu0 0.0
      %1117 = vmatprep.subr.mxu0 0.0
      %1118 = vmatpush1.msra.mxu0 0.0
      %1119 = vmatprep.subr.mxu0 0.0
      %1120 = vmatpush1.msra.mxu0 0.0
      %1121 = vmatprep.subr.mxu0 0.0
      %1122 = vmatpush1.msra.mxu0 0.0
      %1123 = vmatprep.subr.mxu0 0.0
      %1124 = vmatpush1.msra.mxu0 0.0
      %1125 = vmatprep.subr.mxu0 0.0
      %1126 = vmatpush1.msra.mxu0 0.0
      %1127 = vmatprep.subr.mxu0 0.0
      %1128 = vmatpush1.msra.mxu0 0.0
      %1129 = vmatprep.subr.mxu0 0.0
      %1130 = vmatpush1.msra.mxu0 0.0
      %1131 = vmatprep.mubr.f32.mxu0 %v1044
      %1132 = vmatmul.mubr.f32.gmra.mrb[0].mxu0 %v979
      %v1133 = vpop.f32.mrb[0].mxu0
      %v1134 = vadd.f32 %v1006, %v1133
      %v1135 = vpop.f32.mrb[0].mxu0
      %1136 = vmatprep.mubr.f32.mxu0 %v1047
      %1137 = vmatmul.mubr.f32.gmra.mrb[0].mxu0 %v981
      %v1138 = vpop.f32.mrb[0].mxu0
      %v1139 = vadd.f32 %v1011, %v1138
      %v1140 = vpop.f32.mrb[0].mxu0
      %1141 = vmatprep.mubr.f32.mxu0 %v1050
      %1142 = vmatmul.mubr.f32.gmra.mrb[0].mxu0 %v983
      %v1143 = vpop.f32.mrb[0].mxu0
      %v1144 = vadd.f32 %v1016, %v1143
      %v1145 = vpop.f32.mrb[0].mxu0
      %1146 = vmatprep.mubr.f32.mxu0 %v1053
      %1147 = vmatmul.mubr.f32.gmra.mrb[0].mxu0 %v985
      %v1148 = vpop.f32.mrb[0].mxu0
      %v1149 = vadd.f32 %v1021, %v1148
      %v1150 = vpop.f32.mrb[0].mxu0
      %1151 = vmatprep.mubr.f32.mxu0 %v1056
      %1152 = vmatmul.mubr.f32.gmra.mrb[0].mxu0 %v987
      %v1153 = vpop.f32.mrb[0].mxu0
      %v1154 = vadd.f32 %v1026, %v1153
      %v1155 = vpop.f32.mrb[0].mxu0
      %1156 = vmatprep.mubr.f32.mxu0 %v1059
      %1157 = vmatmul.mubr.f32.gmra.mrb[0].mxu0 %v989
      %v1158 = vpop.f32.mrb[0].mxu0
      %v1159 = vadd.f32 %v1031, %v1158
      %v1160 = vpop.f32.mrb[0].mxu0
      %1161 = vmatprep.mubr.f32.mxu0 %v1062
      %1162 = vmatmul.mubr.f32.gmra.mrb[0].mxu0 %v991
      %v1163 = vpop.f32.mrb[0].mxu0
      %v1164 = vadd.f32 %v1036, %v1163
      %v1165 = vpop.f32.mrb[0].mxu0
      %1166 = vmatprep.mubr.f32.mxu0 %v1065
      %1167 = vmatmul.mubr.f32.gmra.mrb[0].mxu0 %v993
      %v1168 = vpop.f32.mrb[0].mxu0
      %v1169 = vadd.f32 %v1041, %v1168
      %v1170 = vpop.f32.mrb[0].mxu0
      %1171 = vdwg.mxu0
      %v1172 = vlaneseq
      %v1173 = vand.u32 %v1172, 127
      %vm1174 = vcmp.lt.s32.totalorder %v1173, 0
      %v1175 = vsub.s32 0, %v1173
      %v1176 = vsel %vm1174, %v1175, %v1173
      %v1177 = vshrl.u32 %v1176, 3
      %v1178 = vand.u32 %v1176, 7
      %v1179 = vsub.s32 0, %v1178
      %v1180 = vsel %vm1174, %v1179, %v1178
      %vm1181 = vcmp.ne.s32.totalorder %v1180, 0
      %vm1182 = vcmp.lt.s32.totalorder %v1180, 0
      %vm1183 = vmand %vm1182, %vm1181
      %v1184 = vadd.s32 %v1180, 8
      %v1185 = vsel %vm1183, %v1184, %v1180
      %vm1186 = vcmp.ne.s32.totalorder %v1185, 7
      %vm1187 = vcmp.lt.s32.totalorder %v1173, 56
      %vm1188 = vmand %vm1186, %vm1187
      %1197 = vrot.lane.b32.xlu0 %v1134, 127
      %v1198 = vpop.permute.xlu0 %1197
      %1199 = vrot.lane.b32.xlu0 %v1139, 127
      %v1200 = vpop.permute.xlu0 %1199
      %1201 = vrot.lane.b32.xlu0 %v1144, 127
      %v1202 = vpop.permute.xlu0 %1201
      %1203 = vrot.lane.b32.xlu0 %v1149, 127
      %v1204 = vpop.permute.xlu0 %1203
      %1205 = vrot.lane.b32.xlu0 %v1154, 127
      %v1206 = vpop.permute.xlu0 %1205
      %1207 = vrot.lane.b32.xlu0 %v1159, 127
      %v1208 = vpop.permute.xlu0 %1207
      %1209 = vrot.lane.b32.xlu0 %v1164, 127
      %v1210 = vpop.permute.xlu0 %1209
      %1211 = vrot.lane.b32.xlu0 %v1169, 127
      %v1212 = vpop.permute.xlu0 %1211
      %vm1221 = vcmask 515072
      %v1222 = vsel %vm1221, %v1198, 0.0
      %v1223 = vsel %vm1221, %v1200, 0.0
      %v1224 = vsel %vm1221, %v1202, 0.0
      %v1225 = vsel %vm1221, %v1204, 0.0
      %v1226 = vsel %vm1221, %v1206, 0.0
      %v1227 = vsel %vm1221, %v1208, 0.0
      %v1228 = vsel %vm1221, %v1210, 0.0
      %v1229 = vsel %vm1221, %v1212, 0.0
      %v1230 = vsel %vm1186, 1, 0
      %vm1231 = vcmp.eq.s32.totalorder %v1230, 1
      %v1232 = vsel %vm1231, %v1222, 0.0
      %v1233 = vsel %vm1231, %v1223, 0.0
      %v1234 = vsel %vm1231, %v1224, 0.0
      %v1235 = vsel %vm1231, %v1225, 0.0
      %v1236 = vsel %vm1231, %v1226, 0.0
      %v1237 = vsel %vm1231, %v1227, 0.0
      %v1238 = vsel %vm1231, %v1228, 0.0
      %v1239 = vsel %vm1231, %v1229, 0.0
      %1240 = vrot.lane.b32.xlu0 %v1134, 120
      %v1241 = vpop.permute.xlu0 %1240
      %1242 = vrot.lane.b32.xlu0 %v1139, 120
      %v1243 = vpop.permute.xlu0 %1242
      %1244 = vrot.lane.b32.xlu0 %v1144, 120
      %v1245 = vpop.permute.xlu0 %1244
      %1246 = vrot.lane.b32.xlu0 %v1149, 120
      %v1247 = vpop.permute.xlu0 %1246
      %1248 = vrot.lane.b32.xlu0 %v1154, 120
      %v1249 = vpop.permute.xlu0 %1248
      %1250 = vrot.lane.b32.xlu0 %v1159, 120
      %v1251 = vpop.permute.xlu0 %1250
      %1252 = vrot.lane.b32.xlu0 %v1164, 120
      %v1253 = vpop.permute.xlu0 %1252
      %1254 = vrot.lane.b32.xlu0 %v1169, 120
      %v1255 = vpop.permute.xlu0 %1254
      %vm1264 = vcmask 457728
      %v1265 = vsel %vm1264, %v1241, 0.0
      %v1266 = vsel %vm1264, %v1243, 0.0
      %v1267 = vsel %vm1264, %v1245, 0.0
      %v1268 = vsel %vm1264, %v1247, 0.0
      %v1269 = vsel %vm1264, %v1249, 0.0
      %v1270 = vsel %vm1264, %v1251, 0.0
      %v1271 = vsel %vm1264, %v1253, 0.0
      %v1272 = vsel %vm1264, %v1255, 0.0
      %v1273 = vsel %vm1187, 1, 0
      %vm1274 = vcmp.eq.s32.totalorder %v1273, 1
      %v1275 = vsel %vm1274, %v1265, 0.0
      %v1276 = vsel %vm1274, %v1266, 0.0
      %v1277 = vsel %vm1274, %v1267, 0.0
      %v1278 = vsel %vm1274, %v1268, 0.0
      %v1279 = vsel %vm1274, %v1269, 0.0
      %v1280 = vsel %vm1274, %v1270, 0.0
      %v1281 = vsel %vm1274, %v1271, 0.0
      %v1282 = vsel %vm1274, %v1272, 0.0
      %1283 = vrot.lane.b32.xlu0 %v1134, 119
      %v1284 = vpop.permute.xlu0 %1283
      %1285 = vrot.lane.b32.xlu0 %v1139, 119
      %v1286 = vpop.permute.xlu0 %1285
      %1287 = vrot.lane.b32.xlu0 %v1144, 119
      %v1288 = vpop.permute.xlu0 %1287
      %1289 = vrot.lane.b32.xlu0 %v1149, 119
      %v1290 = vpop.permute.xlu0 %1289
      %1291 = vrot.lane.b32.xlu0 %v1154, 119
      %v1292 = vpop.permute.xlu0 %1291
      %1293 = vrot.lane.b32.xlu0 %v1159, 119
      %v1294 = vpop.permute.xlu0 %1293
      %1295 = vrot.lane.b32.xlu0 %v1164, 119
      %v1296 = vpop.permute.xlu0 %1295
      %1297 = vrot.lane.b32.xlu0 %v1169, 119
      %v1298 = vpop.permute.xlu0 %1297
      %vm1307 = vcmask 449536
      %v1308 = vsel %vm1307, %v1284, 0.0
      %v1309 = vsel %vm1307, %v1286, 0.0
      %v1310 = vsel %vm1307, %v1288, 0.0
      %v1311 = vsel %vm1307, %v1290, 0.0
      %v1312 = vsel %vm1307, %v1292, 0.0
      %v1313 = vsel %vm1307, %v1294, 0.0
      %v1314 = vsel %vm1307, %v1296, 0.0
      %v1315 = vsel %vm1307, %v1298, 0.0
      %v1316 = vsel %vm1188, 1, 0
      %vm1317 = vcmp.eq.s32.totalorder %v1316, 1
      %v1318 = vsel %vm1317, %v1308, 0.0
      %v1319 = vsel %vm1317, %v1309, 0.0
      %v1320 = vsel %vm1317, %v1310, 0.0
      %v1321 = vsel %vm1317, %v1311, 0.0
      %v1322 = vsel %vm1317, %v1312, 0.0
      %v1323 = vsel %vm1317, %v1313, 0.0
      %v1324 = vsel %vm1317, %v1314, 0.0
      %v1325 = vsel %vm1317, %v1315, 0.0
      %v1326 = vld [vmem:[%s8] sm:$0xff]
      %v1327 = vld [vmem:[%s8 + $0x8] sm:$0xff]
      %v1328 = vld [vmem:[%s8 + $0x10] sm:$0xff]
      %v1329 = vld [vmem:[%s8 + $0x18] sm:$0xff]
      %v1330 = vld [vmem:[%s8 + $0x20] sm:$0xff]
      %v1331 = vld [vmem:[%s8 + $0x28] sm:$0xff]
      %v1332 = vld [vmem:[%s8 + $0x30] sm:$0xff]
      %v1333 = vld [vmem:[%s8 + $0x38] sm:$0xff]
      %v1334 = vld [vmem:[%s8 + $0x40] sm:$0xff]
      %v1335 = vld [vmem:[%s8 + $0x48] sm:$0xff]
      %v1336 = vld [vmem:[%s8 + $0x50] sm:$0xff]
      %v1337 = vld [vmem:[%s8 + $0x58] sm:$0xff]
      %v1338 = vld [vmem:[%s8 + $0x60] sm:$0xff]
      %v1339 = vld [vmem:[%s8 + $0x68] sm:$0xff]
      %v1340 = vld [vmem:[%s8 + $0x70] sm:$0xff]
      %v1341 = vld [vmem:[%s8 + $0x78] sm:$0xff]
      %v1342 = vld [vmem:[%s8 + $0x80] sm:$0xff]
      %v1343 = vld [vmem:[%s8 + $0x88] sm:$0xff]
      %v1344 = vld [vmem:[%s8 + $0x90] sm:$0xff]
      %v1345 = vld [vmem:[%s8 + $0x98] sm:$0xff]
      %v1346 = vld [vmem:[%s8 + $0xa0] sm:$0xff]
      %v1347 = vld [vmem:[%s8 + $0xa8] sm:$0xff]
      %v1348 = vld [vmem:[%s8 + $0xb0] sm:$0xff]
      %v1349 = vld [vmem:[%s8 + $0xb8] sm:$0xff]
      %v1350 = vld [vmem:[%s8 + $0xc0] sm:$0xff]
      %v1351 = vld [vmem:[%s8 + $0xc8] sm:$0xff]
      %v1352 = vld [vmem:[%s8 + $0xd0] sm:$0xff]
      %v1353 = vld [vmem:[%s8 + $0xd8] sm:$0xff]
      %v1354 = vld [vmem:[%s8 + $0xe0] sm:$0xff]
      %v1355 = vld [vmem:[%s8 + $0xe8] sm:$0xff]
      %v1356 = vld [vmem:[%s8 + $0xf0] sm:$0xff]
      %v1357 = vld [vmem:[%s8 + $0xf8] sm:$0xff]
      %v1358 = vld [vmem:[%s9] sm:$0xff]
      %v1359 = vld [vmem:[%s9 + $0x8] sm:$0xff]
      %v1360 = vld [vmem:[%s9 + $0x10] sm:$0xff]
      %v1361 = vld [vmem:[%s9 + $0x18] sm:$0xff]
      %v1362 = vld [vmem:[%s9 + $0x20] sm:$0xff]
      %v1363 = vld [vmem:[%s9 + $0x28] sm:$0xff]
      %v1364 = vld [vmem:[%s9 + $0x30] sm:$0xff]
      %v1365 = vld [vmem:[%s9 + $0x38] sm:$0xff]
      %v1366 = vld [vmem:[%s9 + $0x40] sm:$0xff]
      %v1367 = vld [vmem:[%s9 + $0x48] sm:$0xff]
      %v1368 = vld [vmem:[%s9 + $0x50] sm:$0xff]
      %v1369 = vld [vmem:[%s9 + $0x58] sm:$0xff]
      %v1370 = vld [vmem:[%s9 + $0x60] sm:$0xff]
      %v1371 = vld [vmem:[%s9 + $0x68] sm:$0xff]
      %v1372 = vld [vmem:[%s9 + $0x70] sm:$0xff]
      %v1373 = vld [vmem:[%s9 + $0x78] sm:$0xff]
      %1375 = vset.pattern.permute.xlu0 0
      %1376 = vperm.xlu0 %1375, %v1358
      %v1377 = vpop.permute.xlu0 %1376
      %1380 = vset.pattern.permute.xlu0 0
      %1381 = vperm.xlu0 %1380, %v1359
      %v1382 = vpop.permute.xlu0 %1381
      %1385 = vset.pattern.permute.xlu0 0
      %1386 = vperm.xlu0 %1385, %v1360
      %v1387 = vpop.permute.xlu0 %1386
      %1390 = vset.pattern.permute.xlu0 0
      %1391 = vperm.xlu0 %1390, %v1361
      %v1392 = vpop.permute.xlu0 %1391
      %1395 = vset.pattern.permute.xlu0 0
      %1396 = vperm.xlu0 %1395, %v1362
      %v1397 = vpop.permute.xlu0 %1396
      %1400 = vset.pattern.permute.xlu0 0
      %1401 = vperm.xlu0 %1400, %v1363
      %v1402 = vpop.permute.xlu0 %1401
      %1405 = vset.pattern.permute.xlu0 0
      %1406 = vperm.xlu0 %1405, %v1364
      %v1407 = vpop.permute.xlu0 %1406
      %1410 = vset.pattern.permute.xlu0 0
      %1411 = vperm.xlu0 %1410, %v1365
      %v1412 = vpop.permute.xlu0 %1411
      %1415 = vset.pattern.permute.xlu0 0
      %1416 = vperm.xlu0 %1415, %v1366
      %v1417 = vpop.permute.xlu0 %1416
      %1420 = vset.pattern.permute.xlu0 0
      %1421 = vperm.xlu0 %1420, %v1367
      %v1422 = vpop.permute.xlu0 %1421
      %1425 = vset.pattern.permute.xlu0 0
      %1426 = vperm.xlu0 %1425, %v1368
      %v1427 = vpop.permute.xlu0 %1426
      %1430 = vset.pattern.permute.xlu0 0
      %1431 = vperm.xlu0 %1430, %v1369
      %v1432 = vpop.permute.xlu0 %1431
      %1435 = vset.pattern.permute.xlu0 0
      %1436 = vperm.xlu0 %1435, %v1370
      %v1437 = vpop.permute.xlu0 %1436
      %1440 = vset.pattern.permute.xlu0 0
      %1441 = vperm.xlu0 %1440, %v1371
      %v1442 = vpop.permute.xlu0 %1441
      %1445 = vset.pattern.permute.xlu0 0
      %1446 = vperm.xlu0 %1445, %v1372
      %v1447 = vpop.permute.xlu0 %1446
      %1450 = vset.pattern.permute.xlu0 0
      %1451 = vperm.xlu0 %1450, %v1373
      %v1452 = vpop.permute.xlu0 %1451
      %1454 = vmatprep.subr.mxu0 0.0
      %1455 = vmatpush1.msra.mxu0 %v1134
      %1456 = vmatprep.subr.mxu0 0.0
      %1457 = vmatpush1.msra.mxu0 %v1139
      %1458 = vmatprep.subr.mxu0 0.0
      %1459 = vmatpush1.msra.mxu0 %v1144
      %1460 = vmatprep.subr.mxu0 0.0
      %1461 = vmatpush1.msra.mxu0 %v1149
      %1462 = vmatprep.subr.mxu0 0.0
      %1463 = vmatpush1.msra.mxu0 %v1154
      %1464 = vmatprep.subr.mxu0 0.0
      %1465 = vmatpush1.msra.mxu0 %v1159
      %1466 = vmatprep.subr.mxu0 0.0
      %1467 = vmatpush1.msra.mxu0 %v1164
      %1468 = vmatprep.subr.mxu0 0.0
      %1469 = vmatpush1.msra.mxu0 %v1169
      %1470 = vmatprep.subr.mxu0 0.0
      %1471 = vmatpush1.msra.mxu0 %v1232
      %1472 = vmatprep.subr.mxu0 0.0
      %1473 = vmatpush1.msra.mxu0 %v1233
      %1474 = vmatprep.subr.mxu0 0.0
      %1475 = vmatpush1.msra.mxu0 %v1234
      %1476 = vmatprep.subr.mxu0 0.0
      %1477 = vmatpush1.msra.mxu0 %v1235
      %1478 = vmatprep.subr.mxu0 0.0
      %1479 = vmatpush1.msra.mxu0 %v1236
      %1480 = vmatprep.subr.mxu0 0.0
      %1481 = vmatpush1.msra.mxu0 %v1237
      %1482 = vmatprep.subr.mxu0 0.0
      %1483 = vmatpush1.msra.mxu0 %v1238
      %1484 = vmatprep.subr.mxu0 0.0
      %1485 = vmatpush1.msra.mxu0 %v1239
      %1486 = vmatprep.subr.mxu0 0.0
      %1487 = vmatpush1.msra.mxu0 %v1275
      %1488 = vmatprep.subr.mxu0 0.0
      %1489 = vmatpush1.msra.mxu0 %v1276
      %1490 = vmatprep.subr.mxu0 0.0
      %1491 = vmatpush1.msra.mxu0 %v1277
      %1492 = vmatprep.subr.mxu0 0.0
      %1493 = vmatpush1.msra.mxu0 %v1278
      %1494 = vmatprep.subr.mxu0 0.0
      %1495 = vmatpush1.msra.mxu0 %v1279
      %1496 = vmatprep.subr.mxu0 0.0
      %1497 = vmatpush1.msra.mxu0 %v1280
      %1498 = vmatprep.subr.mxu0 0.0
      %1499 = vmatpush1.msra.mxu0 %v1281
      %1500 = vmatprep.subr.mxu0 0.0
      %1501 = vmatpush1.msra.mxu0 %v1282
      %1502 = vmatprep.subr.mxu0 0.0
      %1503 = vmatpush1.msra.mxu0 %v1318
      %1504 = vmatprep.subr.mxu0 0.0
      %1505 = vmatpush1.msra.mxu0 %v1319
      %1506 = vmatprep.subr.mxu0 0.0
      %1507 = vmatpush1.msra.mxu0 %v1320
      %1508 = vmatprep.subr.mxu0 0.0
      %1509 = vmatpush1.msra.mxu0 %v1321
      %1510 = vmatprep.subr.mxu0 0.0
      %1511 = vmatpush1.msra.mxu0 %v1322
      %1512 = vmatprep.subr.mxu0 0.0
      %1513 = vmatpush1.msra.mxu0 %v1323
      %1514 = vmatprep.subr.mxu0 0.0
      %1515 = vmatpush1.msra.mxu0 %v1324
      %1516 = vmatprep.subr.mxu0 0.0
      %1517 = vmatpush1.msra.mxu0 %v1325
      %1518 = vmatprep.mubr.f32.mxu0 %v1327
      %1519 = vmatmul.mubr.f32.gmra.mrb[0].mxu0 %v1326
      %v1520 = vpop.f32.mrb[0].mxu0
      %v1521 = vadd.f32 %v1377, %v1520
      %v1522 = vpop.f32.mrb[0].mxu0
      %1523 = vmatprep.mubr.f32.mxu0 %v1329
      %1524 = vmatmul.mubr.f32.gmra.mrb[0].mxu0 %v1328
      %v1525 = vpop.f32.mrb[0].mxu0
      %v1526 = vadd.f32 %v1382, %v1525
      %v1527 = vpop.f32.mrb[0].mxu0
      %1528 = vmatprep.mubr.f32.mxu0 %v1331
      %1529 = vmatmul.mubr.f32.gmra.mrb[0].mxu0 %v1330
      %v1530 = vpop.f32.mrb[0].mxu0
      %v1531 = vadd.f32 %v1387, %v1530
      %v1532 = vpop.f32.mrb[0].mxu0
      %1533 = vmatprep.mubr.f32.mxu0 %v1333
      %1534 = vmatmul.mubr.f32.gmra.mrb[0].mxu0 %v1332
      %v1535 = vpop.f32.mrb[0].mxu0
      %v1536 = vadd.f32 %v1392, %v1535
      %v1537 = vpop.f32.mrb[0].mxu0
      %1538 = vmatprep.mubr.f32.mxu0 %v1335
      %1539 = vmatmul.mubr.f32.gmra.mrb[0].mxu0 %v1334
      %v1540 = vpop.f32.mrb[0].mxu0
      %v1541 = vadd.f32 %v1397, %v1540
      %v1542 = vpop.f32.mrb[0].mxu0
      %1543 = vmatprep.mubr.f32.mxu0 %v1337
      %1544 = vmatmul.mubr.f32.gmra.mrb[0].mxu0 %v1336
      %v1545 = vpop.f32.mrb[0].mxu0
      %v1546 = vadd.f32 %v1402, %v1545
      %v1547 = vpop.f32.mrb[0].mxu0
      %1548 = vmatprep.mubr.f32.mxu0 %v1339
      %1549 = vmatmul.mubr.f32.gmra.mrb[0].mxu0 %v1338
      %v1550 = vpop.f32.mrb[0].mxu0
      %v1551 = vadd.f32 %v1407, %v1550
      %v1552 = vpop.f32.mrb[0].mxu0
      %1553 = vmatprep.mubr.f32.mxu0 %v1341
      %1554 = vmatmul.mubr.f32.gmra.mrb[0].mxu0 %v1340
      %v1555 = vpop.f32.mrb[0].mxu0
      %v1556 = vadd.f32 %v1412, %v1555
      %v1557 = vpop.f32.mrb[0].mxu0
      %1558 = vmatprep.mubr.f32.mxu0 %v1343
      %1559 = vmatmul.mubr.f32.gmra.mrb[0].mxu0 %v1342
      %v1560 = vpop.f32.mrb[0].mxu0
      %v1561 = vadd.f32 %v1417, %v1560
      %v1562 = vpop.f32.mrb[0].mxu0
      %1563 = vmatprep.mubr.f32.mxu0 %v1345
      %1564 = vmatmul.mubr.f32.gmra.mrb[0].mxu0 %v1344
      %v1565 = vpop.f32.mrb[0].mxu0
      %v1566 = vadd.f32 %v1422, %v1565
      %v1567 = vpop.f32.mrb[0].mxu0
      %1568 = vmatprep.mubr.f32.mxu0 %v1347
      %1569 = vmatmul.mubr.f32.gmra.mrb[0].mxu0 %v1346
      %v1570 = vpop.f32.mrb[0].mxu0
      %v1571 = vadd.f32 %v1427, %v1570
      %v1572 = vpop.f32.mrb[0].mxu0
      %1573 = vmatprep.mubr.f32.mxu0 %v1349
      %1574 = vmatmul.mubr.f32.gmra.mrb[0].mxu0 %v1348
      %v1575 = vpop.f32.mrb[0].mxu0
      %v1576 = vadd.f32 %v1432, %v1575
      %v1577 = vpop.f32.mrb[0].mxu0
      %1578 = vmatprep.mubr.f32.mxu0 %v1351
      %1579 = vmatmul.mubr.f32.gmra.mrb[0].mxu0 %v1350
      %v1580 = vpop.f32.mrb[0].mxu0
      %v1581 = vadd.f32 %v1437, %v1580
      %v1582 = vpop.f32.mrb[0].mxu0
      %1583 = vmatprep.mubr.f32.mxu0 %v1353
      %1584 = vmatmul.mubr.f32.gmra.mrb[0].mxu0 %v1352
      %v1585 = vpop.f32.mrb[0].mxu0
      %v1586 = vadd.f32 %v1442, %v1585
      %v1587 = vpop.f32.mrb[0].mxu0
      %1588 = vmatprep.mubr.f32.mxu0 %v1355
      %1589 = vmatmul.mubr.f32.gmra.mrb[0].mxu0 %v1354
      %v1590 = vpop.f32.mrb[0].mxu0
      %v1591 = vadd.f32 %v1447, %v1590
      %v1592 = vpop.f32.mrb[0].mxu0
      %1593 = vmatprep.mubr.f32.mxu0 %v1357
      %1594 = vmatmul.mubr.f32.gmra.mrb[0].mxu0 %v1356
      %v1595 = vpop.f32.mrb[0].mxu0
      %v1596 = vadd.f32 %v1452, %v1595
      %v1597 = vpop.f32.mrb[0].mxu0
      %1598 = vdwg.mxu0
      %v1599 = vmax.f32 %v1521, 0.0
      %v1600 = vmax.f32 %v1526, 0.0
      %v1601 = vmax.f32 %v1531, 0.0
      %v1602 = vmax.f32 %v1536, 0.0
      %v1603 = vmax.f32 %v1541, 0.0
      %v1604 = vmax.f32 %v1546, 0.0
      %v1605 = vmax.f32 %v1551, 0.0
      %v1606 = vmax.f32 %v1556, 0.0
      %v1607 = vmax.f32 %v1561, 0.0
      %v1608 = vmax.f32 %v1566, 0.0
      %v1609 = vmax.f32 %v1571, 0.0
      %v1610 = vmax.f32 %v1576, 0.0
      %v1611 = vmax.f32 %v1581, 0.0
      %v1612 = vmax.f32 %v1586, 0.0
      %v1613 = vmax.f32 %v1591, 0.0
      %v1614 = vmax.f32 %v1596, 0.0
      %v1615 = vmin.f32 %v1599, 6.0
      %v1616 = vmin.f32 %v1600, 6.0
      %v1617 = vmin.f32 %v1601, 6.0
      %v1618 = vmin.f32 %v1602, 6.0
      %v1619 = vmin.f32 %v1603, 6.0
      %v1620 = vmin.f32 %v1604, 6.0
      %v1621 = vmin.f32 %v1605, 6.0
      %v1622 = vmin.f32 %v1606, 6.0
      %v1623 = vmin.f32 %v1607, 6.0
      %v1624 = vmin.f32 %v1608, 6.0
      %v1625 = vmin.f32 %v1609, 6.0
      %v1626 = vmin.f32 %v1610, 6.0
      %v1627 = vmin.f32 %v1611, 6.0
      %v1628 = vmin.f32 %v1612, 6.0
      %v1629 = vmin.f32 %v1613, 6.0
      %v1630 = vmin.f32 %v1614, 6.0
      %1639 = vrot.lane.b32.xlu0 %v1615, 127
      %v1640 = vpop.permute.xlu0 %1639
      %1641 = vrot.lane.b32.xlu0 %v1616, 127
      %v1642 = vpop.permute.xlu0 %1641
      %1643 = vrot.lane.b32.xlu0 %v1617, 127
      %v1644 = vpop.permute.xlu0 %1643
      %1645 = vrot.lane.b32.xlu0 %v1618, 127
      %v1646 = vpop.permute.xlu0 %1645
      %1647 = vrot.lane.b32.xlu0 %v1623, 127
      %v1648 = vpop.permute.xlu0 %1647
      %1649 = vrot.lane.b32.xlu0 %v1624, 127
      %v1650 = vpop.permute.xlu0 %1649
      %1651 = vrot.lane.b32.xlu0 %v1625, 127
      %v1652 = vpop.permute.xlu0 %1651
      %1653 = vrot.lane.b32.xlu0 %v1626, 127
      %v1654 = vpop.permute.xlu0 %1653
      %v1663 = vsel %vm1221, %v1640, 0.0
      %v1664 = vsel %vm1221, %v1642, 0.0
      %v1665 = vsel %vm1221, %v1644, 0.0
      %v1666 = vsel %vm1221, %v1646, 0.0
      %v1667 = vsel %vm1221, %v1648, 0.0
      %v1668 = vsel %vm1221, %v1650, 0.0
      %v1669 = vsel %vm1221, %v1652, 0.0
      %v1670 = vsel %vm1221, %v1654, 0.0
      %v1671 = vsel %vm1231, %v1663, 0.0
      %v1672 = vsel %vm1231, %v1664, 0.0
      %v1673 = vsel %vm1231, %v1665, 0.0
      %v1674 = vsel %vm1231, %v1666, 0.0
      %v1675 = vsel %vm1231, %v1667, 0.0
      %v1676 = vsel %vm1231, %v1668, 0.0
      %v1677 = vsel %vm1231, %v1669, 0.0
      %v1678 = vsel %vm1231, %v1670, 0.0
      %1683 = vrot.lane.b32.xlu0 %v1615, 120
      %v1684 = vpop.permute.xlu0 %1683
      %1685 = vrot.lane.b32.xlu0 %v1616, 120
      %v1686 = vpop.permute.xlu0 %1685
      %1687 = vrot.lane.b32.xlu0 %v1617, 120
      %v1688 = vpop.permute.xlu0 %1687
      %1689 = vrot.lane.b32.xlu0 %v1618, 120
      %v1690 = vpop.permute.xlu0 %1689
      %1691 = vrot.lane.b32.xlu0 %v1619, 120
      %v1692 = vpop.permute.xlu0 %1691
      %1693 = vrot.lane.b32.xlu0 %v1620, 120
      %v1694 = vpop.permute.xlu0 %1693
      %1695 = vrot.lane.b32.xlu0 %v1621, 120
      %v1696 = vpop.permute.xlu0 %1695
      %1697 = vrot.lane.b32.xlu0 %v1622, 120
      %v1698 = vpop.permute.xlu0 %1697
      %v1707 = vsel %vm1264, %v1684, 0.0
      %v1708 = vsel %vm1264, %v1686, 0.0
      %v1709 = vsel %vm1264, %v1688, 0.0
      %v1710 = vsel %vm1264, %v1690, 0.0
      %v1711 = vsel %vm1264, %v1692, 0.0
      %v1712 = vsel %vm1264, %v1694, 0.0
      %v1713 = vsel %vm1264, %v1696, 0.0
      %v1714 = vsel %vm1264, %v1698, 0.0
      %v1715 = vsel %vm1274, %v1707, 0.0
      %v1716 = vsel %vm1274, %v1708, 0.0
      %v1717 = vsel %vm1274, %v1709, 0.0
      %v1718 = vsel %vm1274, %v1710, 0.0
      %v1719 = vsel %vm1274, %v1711, 0.0
      %v1720 = vsel %vm1274, %v1712, 0.0
      %v1721 = vsel %vm1274, %v1713, 0.0
      %v1722 = vsel %vm1274, %v1714, 0.0
      %1723 = vrot.lane.b32.xlu0 %v1615, 119
      %v1724 = vpop.permute.xlu0 %1723
      %1725 = vrot.lane.b32.xlu0 %v1616, 119
      %v1726 = vpop.permute.xlu0 %1725
      %1727 = vrot.lane.b32.xlu0 %v1617, 119
      %v1728 = vpop.permute.xlu0 %1727
      %1729 = vrot.lane.b32.xlu0 %v1618, 119
      %v1730 = vpop.permute.xlu0 %1729
      %v1735 = vsel %vm1307, %v1724, 0.0
      %v1736 = vsel %vm1307, %v1726, 0.0
      %v1737 = vsel %vm1307, %v1728, 0.0
      %v1738 = vsel %vm1307, %v1730, 0.0
      %v1739 = vsel %vm1317, %v1735, 0.0
      %v1740 = vsel %vm1317, %v1736, 0.0
      %v1741 = vsel %vm1317, %v1737, 0.0
      %v1742 = vsel %vm1317, %v1738, 0.0
      %1755 = vrot.lane.b32.xlu0 %v1619, 64
      %v1756 = vpop.permute.xlu0 %1755
      %1757 = vrot.lane.b32.xlu0 %v1620, 64
      %v1758 = vpop.permute.xlu0 %1757
      %1759 = vrot.lane.b32.xlu0 %v1621, 64
      %v1760 = vpop.permute.xlu0 %1759
      %1761 = vrot.lane.b32.xlu0 %v1622, 64
      %v1762 = vpop.permute.xlu0 %1761
      %1763 = vrot.lane.b32.xlu0 %v1671, 64
      %v1764 = vpop.permute.xlu0 %1763
      %1765 = vrot.lane.b32.xlu0 %v1672, 64
      %v1766 = vpop.permute.xlu0 %1765
      %1767 = vrot.lane.b32.xlu0 %v1673, 64
      %v1768 = vpop.permute.xlu0 %1767
      %1769 = vrot.lane.b32.xlu0 %v1674, 64
      %v1770 = vpop.permute.xlu0 %1769
      %1771 = vrot.lane.b32.xlu0 %v1627, 64
      %v1772 = vpop.permute.xlu0 %1771
      %1773 = vrot.lane.b32.xlu0 %v1628, 64
      %v1774 = vpop.permute.xlu0 %1773
      %1775 = vrot.lane.b32.xlu0 %v1629, 64
      %v1776 = vpop.permute.xlu0 %1775
      %1777 = vrot.lane.b32.xlu0 %v1630, 64
      %v1778 = vpop.permute.xlu0 %1777
      %1779 = vrot.lane.b32.xlu0 %v1675, 64
      %v1780 = vpop.permute.xlu0 %1779
      %1781 = vrot.lane.b32.xlu0 %v1676, 64
      %v1782 = vpop.permute.xlu0 %1781
      %1783 = vrot.lane.b32.xlu0 %v1677, 64
      %v1784 = vpop.permute.xlu0 %1783
      %1785 = vrot.lane.b32.xlu0 %v1678, 64
      %v1786 = vpop.permute.xlu0 %1785
      %1811 = vrot.lane.b32.xlu0 %v1719, 64
      %v1812 = vpop.permute.xlu0 %1811
      %1813 = vrot.lane.b32.xlu0 %v1720, 64
      %v1814 = vpop.permute.xlu0 %1813
      %1815 = vrot.lane.b32.xlu0 %v1721, 64
      %v1816 = vpop.permute.xlu0 %1815
      %1817 = vrot.lane.b32.xlu0 %v1722, 64
      %v1818 = vpop.permute.xlu0 %1817
      %1819 = vrot.lane.b32.xlu0 %v1739, 64
      %v1820 = vpop.permute.xlu0 %1819
      %1821 = vrot.lane.b32.xlu0 %v1740, 64
      %v1822 = vpop.permute.xlu0 %1821
      %1823 = vrot.lane.b32.xlu0 %v1741, 64
      %v1824 = vpop.permute.xlu0 %1823
      %1825 = vrot.lane.b32.xlu0 %v1742, 64
      %v1826 = vpop.permute.xlu0 %1825
      %v1835 = vsel %vm505, %v1615, %v1756
      %v1836 = vsel %vm505, %v1616, %v1758
      %v1837 = vsel %vm505, %v1617, %v1760
      %v1838 = vsel %vm505, %v1618, %v1762
      %v1839 = vsel %vm505, %v1619, %v1764
      %v1840 = vsel %vm505, %v1620, %v1766
      %v1841 = vsel %vm505, %v1621, %v1768
      %v1842 = vsel %vm505, %v1622, %v1770
      %v1843 = vsel %vm505, %v1623, %v1772
      %v1844 = vsel %vm505, %v1624, %v1774
      %v1845 = vsel %vm505, %v1625, %v1776
      %v1846 = vsel %vm505, %v1626, %v1778
      %v1847 = vsel %vm505, %v1627, %v1780
      %v1848 = vsel %vm505, %v1628, %v1782
      %v1849 = vsel %vm505, %v1629, %v1784
      %v1850 = vsel %vm505, %v1630, %v1786
      %v1851 = vsel %vm505, %v1715, %v1812
      %v1852 = vsel %vm505, %v1716, %v1814
      %v1853 = vsel %vm505, %v1717, %v1816
      %v1854 = vsel %vm505, %v1718, %v1818
      %v1855 = vsel %vm505, %v1719, %v1820
      %v1856 = vsel %vm505, %v1720, %v1822
      %v1857 = vsel %vm505, %v1721, %v1824
      %v1858 = vsel %vm505, %v1722, %v1826
      %v1859 = vld [vmem:[%s10] sm:$0xff]
      %v1860 = vld [vmem:[%s10 + $0x8] sm:$0xff]
      %v1861 = vld [vmem:[%s10 + $0x10] sm:$0xff]
      %v1862 = vld [vmem:[%s10 + $0x18] sm:$0xff]
      %v1863 = vld [vmem:[%s10 + $0x20] sm:$0xff]
      %v1864 = vld [vmem:[%s10 + $0x28] sm:$0xff]
      %v1865 = vld [vmem:[%s10 + $0x30] sm:$0xff]
      %v1866 = vld [vmem:[%s10 + $0x38] sm:$0xff]
      %v1867 = vld [vmem:[%s11] sm:$0xff]
      %v1868 = vld [vmem:[%s11 + $0x8] sm:$0xff]
      %v1869 = vld [vmem:[%s11 + $0x10] sm:$0xff]
      %v1870 = vld [vmem:[%s11 + $0x18] sm:$0xff]
      %v1871 = vld [vmem:[%s11 + $0x20] sm:$0xff]
      %v1872 = vld [vmem:[%s11 + $0x28] sm:$0xff]
      %v1873 = vld [vmem:[%s11 + $0x30] sm:$0xff]
      %v1874 = vld [vmem:[%s11 + $0x38] sm:$0xff]
      %1876 = vset.pattern.permute.xlu0 0
      %1877 = vperm.xlu0 %1876, %v1867
      %v1878 = vpop.permute.xlu0 %1877
      %1881 = vset.pattern.permute.xlu0 0
      %1882 = vperm.xlu0 %1881, %v1868
      %v1883 = vpop.permute.xlu0 %1882
      %1886 = vset.pattern.permute.xlu0 0
      %1887 = vperm.xlu0 %1886, %v1869
      %v1888 = vpop.permute.xlu0 %1887
      %1891 = vset.pattern.permute.xlu0 0
      %1892 = vperm.xlu0 %1891, %v1870
      %v1893 = vpop.permute.xlu0 %1892
      %1896 = vset.pattern.permute.xlu0 0
      %1897 = vperm.xlu0 %1896, %v1871
      %v1898 = vpop.permute.xlu0 %1897
      %1901 = vset.pattern.permute.xlu0 0
      %1902 = vperm.xlu0 %1901, %v1872
      %v1903 = vpop.permute.xlu0 %1902
      %1906 = vset.pattern.permute.xlu0 0
      %1907 = vperm.xlu0 %1906, %v1873
      %v1908 = vpop.permute.xlu0 %1907
      %1911 = vset.pattern.permute.xlu0 0
      %1912 = vperm.xlu0 %1911, %v1874
      %v1913 = vpop.permute.xlu0 %1912
      %1915 = vmatprep.subr.mxu0 %v1843
      %1916 = vmatpush1.msra.mxu0 %v1835
      %1917 = vmatprep.subr.mxu0 %v1844
      %1918 = vmatpush1.msra.mxu0 %v1836
      %1919 = vmatprep.subr.mxu0 %v1845
      %1920 = vmatpush1.msra.mxu0 %v1837
      %1921 = vmatprep.subr.mxu0 %v1846
      %1922 = vmatpush1.msra.mxu0 %v1838
      %1923 = vmatprep.subr.mxu0 %v1847
      %1924 = vmatpush1.msra.mxu0 %v1839
      %1925 = vmatprep.subr.mxu0 %v1848
      %1926 = vmatpush1.msra.mxu0 %v1840
      %1927 = vmatprep.subr.mxu0 %v1849
      %1928 = vmatpush1.msra.mxu0 %v1841
      %1929 = vmatprep.subr.mxu0 %v1850
      %1930 = vmatpush1.msra.mxu0 %v1842
      %1931 = vmatprep.subr.mxu0 %v1851
      %1932 = vmatpush1.msra.mxu0 %v1843
      %1933 = vmatprep.subr.mxu0 %v1852
      %1934 = vmatpush1.msra.mxu0 %v1844
      %1935 = vmatprep.subr.mxu0 %v1853
      %1936 = vmatpush1.msra.mxu0 %v1845
      %1937 = vmatprep.subr.mxu0 %v1854
      %1938 = vmatpush1.msra.mxu0 %v1846
      %1939 = vmatprep.subr.mxu0 %v1855
      %1940 = vmatpush1.msra.mxu0 %v1847
      %1941 = vmatprep.subr.mxu0 %v1856
      %1942 = vmatpush1.msra.mxu0 %v1848
      %1943 = vmatprep.subr.mxu0 %v1857
      %1944 = vmatpush1.msra.mxu0 %v1849
      %1945 = vmatprep.subr.mxu0 %v1858
      %1946 = vmatpush1.msra.mxu0 %v1850
      %1947 = vmatprep.subr.mxu0 0.0
      %1948 = vmatpush1.msra.mxu0 0.0
      %1949 = vmatprep.subr.mxu0 0.0
      %1950 = vmatpush1.msra.mxu0 0.0
      %1951 = vmatprep.subr.mxu0 0.0
      %1952 = vmatpush1.msra.mxu0 0.0
      %1953 = vmatprep.subr.mxu0 0.0
      %1954 = vmatpush1.msra.mxu0 0.0
      %1955 = vmatprep.subr.mxu0 0.0
      %1956 = vmatpush1.msra.mxu0 0.0
      %1957 = vmatprep.subr.mxu0 0.0
      %1958 = vmatpush1.msra.mxu0 0.0
      %1959 = vmatprep.subr.mxu0 0.0
      %1960 = vmatpush1.msra.mxu0 0.0
      %1961 = vmatprep.subr.mxu0 0.0
      %1962 = vmatpush1.msra.mxu0 0.0
      %1963 = vmatprep.subr.mxu0 0.0
      %1964 = vmatpush1.msra.mxu0 0.0
      %1965 = vmatprep.subr.mxu0 0.0
      %1966 = vmatpush1.msra.mxu0 0.0
      %1967 = vmatprep.subr.mxu0 0.0
      %1968 = vmatpush1.msra.mxu0 0.0
      %1969 = vmatprep.subr.mxu0 0.0
      %1970 = vmatpush1.msra.mxu0 0.0
      %1971 = vmatprep.subr.mxu0 0.0
      %1972 = vmatpush1.msra.mxu0 0.0
      %1973 = vmatprep.subr.mxu0 0.0
      %1974 = vmatpush1.msra.mxu0 0.0
      %1975 = vmatprep.subr.mxu0 0.0
      %1976 = vmatpush1.msra.mxu0 0.0
      %1977 = vmatprep.subr.mxu0 0.0
      %1978 = vmatpush1.msra.mxu0 0.0
      %1979 = vmatprep.mubr.f32.mxu0 0.0
      %1980 = vmatmul.mubr.f32.gmra.mrb[0].mxu0 %v1859
      %v1981 = vpop.f32.mrb[0].mxu0
      %v1982 = vadd.f32 %v1878, %v1981
      %v1983 = vpop.f32.mrb[0].mxu0
      %v1984 = vadd.f32 %v1878, %v1983
      %1985 = vmatprep.mubr.f32.mxu0 0.0
      %1986 = vmatmul.mubr.f32.gmra.mrb[0].mxu0 %v1860
      %v1987 = vpop.f32.mrb[0].mxu0
      %v1988 = vadd.f32 %v1883, %v1987
      %v1989 = vpop.f32.mrb[0].mxu0
      %v1990 = vadd.f32 %v1883, %v1989
      %1991 = vmatprep.mubr.f32.mxu0 0.0
      %1992 = vmatmul.mubr.f32.gmra.mrb[0].mxu0 %v1861
      %v1993 = vpop.f32.mrb[0].mxu0
      %v1994 = vadd.f32 %v1888, %v1993
      %v1995 = vpop.f32.mrb[0].mxu0
      %v1996 = vadd.f32 %v1888, %v1995
      %1997 = vmatprep.mubr.f32.mxu0 0.0
      %1998 = vmatmul.mubr.f32.gmra.mrb[0].mxu0 %v1862
      %v1999 = vpop.f32.mrb[0].mxu0
      %v2000 = vadd.f32 %v1893, %v1999
      %v2001 = vpop.f32.mrb[0].mxu0
      %v2002 = vadd.f32 %v1893, %v2001
      %2003 = vmatprep.mubr.f32.mxu0 0.0
      %2004 = vmatmul.mubr.f32.gmra.mrb[0].mxu0 %v1863
      %v2005 = vpop.f32.mrb[0].mxu0
      %v2006 = vadd.f32 %v1898, %v2005
      %v2007 = vpop.f32.mrb[0].mxu0
      %v2008 = vadd.f32 %v1898, %v2007
      %2009 = vmatprep.mubr.f32.mxu0 0.0
      %2010 = vmatmul.mubr.f32.gmra.mrb[0].mxu0 %v1864
      %v2011 = vpop.f32.mrb[0].mxu0
      %v2012 = vadd.f32 %v1903, %v2011
      %v2013 = vpop.f32.mrb[0].mxu0
      %v2014 = vadd.f32 %v1903, %v2013
      %2015 = vmatprep.mubr.f32.mxu0 0.0
      %2016 = vmatmul.mubr.f32.gmra.mrb[0].mxu0 %v1865
      %v2017 = vpop.f32.mrb[0].mxu0
      %v2018 = vadd.f32 %v1908, %v2017
      %v2019 = vpop.f32.mrb[0].mxu0
      %v2020 = vadd.f32 %v1908, %v2019
      %2021 = vmatprep.mubr.f32.mxu0 0.0
      %2022 = vmatmul.mubr.f32.gmra.mrb[0].mxu0 %v1866
      %v2023 = vpop.f32.mrb[0].mxu0
      %v2024 = vadd.f32 %v1913, %v2023
      %v2025 = vpop.f32.mrb[0].mxu0
      %v2026 = vadd.f32 %v1913, %v2025
      %2027 = vdwg.mxu0
      %v2028 = vmax.f32 %v1982, 0.0
      %v2029 = vmax.f32 %v1984, 0.0
      %v2030 = vmax.f32 %v1988, 0.0
      %v2031 = vmax.f32 %v1990, 0.0
      %v2032 = vmax.f32 %v1994, 0.0
      %v2033 = vmax.f32 %v1996, 0.0
      %v2034 = vmax.f32 %v2000, 0.0
      %v2035 = vmax.f32 %v2002, 0.0
      %v2036 = vmax.f32 %v2006, 0.0
      %v2037 = vmax.f32 %v2008, 0.0
      %v2038 = vmax.f32 %v2012, 0.0
      %v2039 = vmax.f32 %v2014, 0.0
      %v2040 = vmax.f32 %v2018, 0.0
      %v2041 = vmax.f32 %v2020, 0.0
      %v2042 = vmax.f32 %v2024, 0.0
      %v2043 = vmax.f32 %v2026, 0.0
      %v2044 = vmin.f32 %v2028, 6.0
      %v2045 = vmin.f32 %v2029, 6.0
      %v2046 = vmin.f32 %v2030, 6.0
      %v2047 = vmin.f32 %v2031, 6.0
      %v2048 = vmin.f32 %v2032, 6.0
      %v2049 = vmin.f32 %v2033, 6.0
      %v2050 = vmin.f32 %v2034, 6.0
      %v2051 = vmin.f32 %v2035, 6.0
      %v2052 = vmin.f32 %v2036, 6.0
      %v2053 = vmin.f32 %v2037, 6.0
      %v2054 = vmin.f32 %v2038, 6.0
      %v2055 = vmin.f32 %v2039, 6.0
      %v2056 = vmin.f32 %v2040, 6.0
      %v2057 = vmin.f32 %v2041, 6.0
      %v2058 = vmin.f32 %v2042, 6.0
      %v2059 = vmin.f32 %v2043, 6.0
      %v2060 = vld [vmem:[%s12] sm:$0xf]
      %v2061 = vld [vmem:[%s13] sm:$0xf]
      %2063 = vset.pattern.permute.xlu0 0
      %2064 = vperm.xlu0 %2063, %v2061
      %v2065 = vpop.permute.xlu0 %2064
      %v2068 = vsel %vm505, %v2060, 0
      %2070 = vmatprep.subr.mxu0 %v2045
      %2071 = vmatpush1.msra.mxu0 %v2044
      %2072 = vmatprep.subr.mxu0 %v2047
      %2073 = vmatpush1.msra.mxu0 %v2046
      %2074 = vmatprep.subr.mxu0 %v2049
      %2075 = vmatpush1.msra.mxu0 %v2048
      %2076 = vmatprep.subr.mxu0 %v2051
      %2077 = vmatpush1.msra.mxu0 %v2050
      %2078 = vmatprep.subr.mxu0 %v2053
      %2079 = vmatpush1.msra.mxu0 %v2052
      %2080 = vmatprep.subr.mxu0 %v2055
      %2081 = vmatpush1.msra.mxu0 %v2054
      %2082 = vmatprep.subr.mxu0 %v2057
      %2083 = vmatpush1.msra.mxu0 %v2056
      %2084 = vmatprep.subr.mxu0 %v2059
      %2085 = vmatpush1.msra.mxu0 %v2058
      %2086 = vmatprep.subr.mxu0 0.0
      %2087 = vmatpush1.msra.mxu0 0.0
      %2088 = vmatprep.subr.mxu0 0.0
      %2089 = vmatpush1.msra.mxu0 0.0
      %2090 = vmatprep.subr.mxu0 0.0
      %2091 = vmatpush1.msra.mxu0 0.0
      %2092 = vmatprep.subr.mxu0 0.0
      %2093 = vmatpush1.msra.mxu0 0.0
      %2094 = vmatprep.subr.mxu0 0.0
      %2095 = vmatpush1.msra.mxu0 0.0
      %2096 = vmatprep.subr.mxu0 0.0
      %2097 = vmatpush1.msra.mxu0 0.0
      %2098 = vmatprep.subr.mxu0 0.0
      %2099 = vmatpush1.msra.mxu0 0.0
      %2100 = vmatprep.subr.mxu0 0.0
      %2101 = vmatpush1.msra.mxu0 0.0
      %2102 = vmatprep.subr.mxu0 0.0
      %2103 = vmatpush1.msra.mxu0 0.0
      %2104 = vmatprep.subr.mxu0 0.0
      %2105 = vmatpush1.msra.mxu0 0.0
      %2106 = vmatprep.subr.mxu0 0.0
      %2107 = vmatpush1.msra.mxu0 0.0
      %2108 = vmatprep.subr.mxu0 0.0
      %2109 = vmatpush1.msra.mxu0 0.0
      %2110 = vmatprep.subr.mxu0 0.0
      %2111 = vmatpush1.msra.mxu0 0.0
      %2112 = vmatprep.subr.mxu0 0.0
      %2113 = vmatpush1.msra.mxu0 0.0
      %2114 = vmatprep.subr.mxu0 0.0
      %2115 = vmatpush1.msra.mxu0 0.0
      %2116 = vmatprep.subr.mxu0 0.0
      %2117 = vmatpush1.msra.mxu0 0.0
      %2118 = vmatprep.subr.mxu0 0.0
      %2119 = vmatpush1.msra.mxu0 0.0
      %2120 = vmatprep.subr.mxu0 0.0
      %2121 = vmatpush1.msra.mxu0 0.0
      %2122 = vmatprep.subr.mxu0 0.0
      %2123 = vmatpush1.msra.mxu0 0.0
      %2124 = vmatprep.subr.mxu0 0.0
      %2125 = vmatpush1.msra.mxu0 0.0
      %2126 = vmatprep.subr.mxu0 0.0
      %2127 = vmatpush1.msra.mxu0 0.0
      %2128 = vmatprep.subr.mxu0 0.0
      %2129 = vmatpush1.msra.mxu0 0.0
      %2130 = vmatprep.subr.mxu0 0.0
      %2131 = vmatpush1.msra.mxu0 0.0
      %2132 = vmatprep.subr.mxu0 0.0
      %2133 = vmatpush1.msra.mxu0 0.0
      %2134 = vmatprep.mubr.f32.mxu0 0.0
      %2135 = vmatmul.mubr.f32.gmra.mrb[0].mxu0 %v2068
      %v2136 = vpop.f32.mrb[0].mxu0
      %v2137 = vadd.f32 %v2065, %v2136
      %v2138 = vpop.f32.mrb[0].mxu0
      %v2139 = vadd.f32 %v2065, %v2138
      %2140 = vdwg.mxu0
      %v2141 = vsub.f32 0.0, %v2137
      %v2142 = vsub.f32 0.0, %v2139
      %v2143 = vmul.f32 %v2141, 1.442695
      %v2144 = vpow.pop %v2143
      %v2145 = vmul.f32 %v2142, 1.442695
      %v2146 = vpow.pop %v2145
      %v2147 = vadd.f32 %v2144, 1.0
      %v2148 = vadd.f32 %v2146, 1.0
      %v2149 = vrcp.pop %v2147
      %v2150 = vrcp.pop %v2148
      %v2153 = vcombine.low %v2149, %v2150
      %2155 = vst [vmem:[%s487] sm:$0xff] %v2153
      %p2156 = scmp.lt.s32.totalorder %s25, 1
      %s2157 = scalar_select %p2156, %s25, 1
      %s2158 = smul.addr %s2157, 2
      %s2159 = smul.addr %s2158, 4
      %s2160 = scalar_lea.vmem %s14, %s2159
      // Predicated region
      $region77: #{dual_stream_net_forward.1} parent=75 // pred_check
        %p2161 = pneg %p347
      $region78: #{dual_stream_net_forward.1} parent=75 // pred_check_branch
        %2163 = sbr.rel (%p2161) target = $region80
      $region79: #{dual_stream_net_forward.1} parent=75 // pred_region
        _
      $region80: #{dual_stream_net_forward.1} parent=75 // pred_fallthru
        _
    $region76: #{dual_stream_net_forward.1} parent=5 // pred_fallthru
      _
    %p2164 = scmp.le.s32.totalorder 2, %s20
    // Predicated region
    $region81: #{dual_stream_net_forward.1} parent=5 // pred_check
      %p2165 = pneg %p2164
    $region82: #{dual_stream_net_forward.1} parent=5 // pred_check_branch
      %2167 = sbr.rel (%p2165) target = $region84
    $region83: #{dual_stream_net_forward.1} parent=5 // pred_region
      %s2168 = ssub.s32 %s20, 2
      // Predicated region
      $region85: #{dual_stream_net_forward.1} parent=83 // pred_check
        %p2169 = pneg %p353
      $region86: #{dual_stream_net_forward.1} parent=83 // pred_check_branch
        %2171 = sbr.rel (%p2169) target = $region88
      $region87: #{dual_stream_net_forward.1} parent=83 // pred_region
        %p2172 = scmp.lt.s32.totalorder %s26, 1
        %s2173 = scalar_select %p2172, %s26, 1
        %s2174 = smul.addr %s2173, 2
        %s2175 = smul.addr %s2174, 4
        %s2176 = scalar_lea.vmem %s14, %s2175
      $region88: #{dual_stream_net_forward.1} parent=83 // pred_fallthru
        _
    $region84: #{dual_stream_net_forward.1} parent=5 // pred_fallthru
      _
  $region6: #{dual_stream_net_forward.1} parent=0 // loop_footer
    %s24 = sadd.s32 1, %s20
  $region7: #{dual_stream_net_forward.1} parent=0 // loop_footer_branch
    %19 = sbr.rel target = $region3
  $region8: #{dual_stream_net_forward.1} parent=0 // loop_exit
    _

</llo_original>
